<compile_context>
chip_gen: v5e
topology: v5e:2x2
jax: 0.10.0
libtpu: 0.0.40
codegen_flags: <defaults>
</compile_context>

<pallas_src>
import jax
import jax.numpy as jnp
from jax.experimental import pallas as pl
from jax.experimental.pallas import tpu as pltpu

_SQRT2 = 1.4142135623730951
_LN_EPS = 1e-5

# Cast MXU operands to bf16 (accumulation stays f32).  Exact for one-hot
# gather/scatter matrices; negligible effect elsewhere.  Big MXU-rate win on
# v6e/v7x, harmless on v5e since elementwise math stays f32.
USE_BF16_MXU = True


def _gelu_exact(x):
    # PyTorch nn.GELU() default = exact erf formulation
    return 0.5 * x * (1.0 + jax.lax.erf(x / _SQRT2))


def _silu(x):
    return x * jax.nn.sigmoid(x)


def _mx(x):
    return x.astype(jnp.bfloat16) if USE_BF16_MXU else x


def _dot(a, b):
    return jnp.dot(_mx(a), _mx(b), preferred_element_type=jnp.float32)


def _ln(y, g, beta):
    # LayerNorm with biased variance, eps=1e-5 (matches nn.LayerNorm)
    mean = jnp.mean(y, axis=-1, keepdims=True)
    var = jnp.mean(jnp.square(y - mean), axis=-1, keepdims=True)
    return (y - mean) * jax.lax.rsqrt(var + _LN_EPS) * g + beta


# ----------------------------- fused Pallas kernel -----------------------------

def encoder_fused_kernel(
    node_ref, edge_ref, xyz_ref, src_ref, dst_ref, dstT_ref,
    e0w_ref, e0b_ref, e0g_ref, e0bt_ref,
    e1w_ref, e1b_ref, e1g_ref, e1bt_ref,
    ew1s_ref, ew1d_ref, ew1r_ref, ew1e_ref, eb1_ref, ew2_ref, eb2_ref,
    nw1h_ref, nw1n_ref, nb1_ref, nw2_ref, nb2_ref,
    muw_ref, mub_ref, lvw_ref, lvb_ref, eps_ref,
    z_ref, mu_ref, lv_ref,
):
    n_nodes = node_ref.shape[0]
    n_edges = edge_ref.shape[0]

    # ---- initial_node_embedding: 2 x (Linear -> LN -> GELU); Dropout = identity
    h = _gelu_exact(_ln(_dot(node_ref[...], e0w_ref[...]) + e0b_ref[...],
                        e0g_ref[...], e0bt_ref[...]))
    h = _gelu_exact(_ln(_dot(h, e1w_ref[...]) + e1b_ref[...],
                        e1g_ref[...], e1bt_ref[...]))

    # ---- EGNNConv gathers: one-hot matrices built in-kernel (VPU compare) ----
    col = jax.lax.broadcasted_iota(jnp.int32, (n_edges, n_nodes), 1)
    gsrc = (col == src_ref[...]).astype(jnp.float32)          # (E, N)
    gdst = (col == dst_ref[...]).astype(jnp.float32)          # (E, N)
    h_src = _dot(gsrc, h)                                      # (E, C)
    h_dst = _dot(gdst, h)                                      # (E, C)
    # xyz gather kept in f32 for exact coordinates
    x_diff = jnp.dot(gsrc - gdst, xyz_ref[...],
                     preferred_element_type=jnp.float32)       # (E, 3)
    radial = jnp.sum(jnp.square(x_diff), axis=-1, keepdims=True)  # (E, 1)

    # ---- edge MLP (layer 1 concat-free via split weights) ----
    m = (_dot(h_src, ew1s_ref[...])
         + _dot(h_dst, ew1d_ref[...])
         + radial * ew1r_ref[...]
         + _dot(edge_ref[...], ew1e_ref[...])
         + eb1_ref[...])
    msg = _silu(_dot(_silu(m), ew2_ref[...]) + eb2_ref[...])   # (E, C)

    # ---- scatter-sum of messages onto dst nodes: (N, E) one-hot @ (E, C) ----
    row = jax.lax.broadcasted_iota(jnp.int32, (n_nodes, n_edges), 0)
    scat = (row == dstT_ref[...]).astype(jnp.float32)          # (N, E)
    h_neigh = _dot(scat, msg)                                  # (N, C)

    # ---- node MLP (layer 1 concat-free); no final activation ----
    y = _silu(_dot(h, nw1h_ref[...]) + _dot(h_neigh, nw1n_ref[...]) + nb1_ref[...])
    h_out = _dot(y, nw2_ref[...]) + nb2_ref[...]               # (N, C)

    # ---- mu / logvar heads + reparametrize (std = exp(logvar), eps ~ U[0,1)) ----
    mu = _dot(h_out, muw_ref[...]) + mub_ref[...]
    lv = _dot(h_out, lvw_ref[...]) + lvb_ref[...]
    z_ref[...] = eps_ref[...] * jnp.exp(lv) + mu
    mu_ref[...] = mu
    lv_ref[...] = lv


# ------------------------------ pallas_call wrapper ------------------------------

def _vmem():
    return pl.BlockSpec(memory_space=pltpu.MemorySpace.VMEM)


def encoder_forward(p, node_attr, edge_attr, xyz, src, dst, eps):
    n = node_attr.shape[0]
    latent = p["mu_w"].shape[1]

    src2d = src.astype(jnp.int32)[:, None]   # (E, 1) - row-wise gather compare
    dst2d = dst.astype(jnp.int32)[:, None]   # (E, 1)
    dst_t = dst.astype(jnp.int32)[None, :]   # (1, E) - column-wise scatter compare

    args = (node_attr, edge_attr, xyz, src2d, dst2d, dst_t,
            p["emb0_w"], p["emb0_b"], p["emb0_g"], p["emb0_beta"],
            p["emb1_w"], p["emb1_b"], p["emb1_g"], p["emb1_beta"],
            p["e_w1_src"], p["e_w1_dst"], p["e_w1_rad"], p["e_w1_edge"],
            p["e_b1"], p["e_w2"], p["e_b2"],
            p["n_w1_h"], p["n_w1_nb"], p["n_b1"], p["n_w2"], p["n_b2"],
            p["mu_w"], p["mu_b"], p["lv_w"], p["lv_b"], eps)

    shp = jax.ShapeDtypeStruct((n, latent), jnp.float32)
    z, mu, logvar = pl.pallas_call(
        encoder_fused_kernel,
        out_shape=(shp, shp, shp),
        in_specs=[_vmem()] * len(args),
        out_specs=(_vmem(), _vmem(), _vmem()),
    )(*args)
    return z, mu, logvar


# ------------------------------ parameters ------------------------------

def init_params(key, n_input_feats, channels, latent, edge_feat_dim):
    ks = jax.random.split(key, 8)

    def lin(k, fi, fo):
        kw, kb = jax.random.split(k)
        lim = 1.0 / jnp.sqrt(jnp.float32(fi))
        w = jax.random.uniform(kw, (fi, fo), jnp.float32, -lim, lim)
        b = jax.random.uniform(kb, (1, fo), jnp.float32, -lim, lim)
        return w, b

    p = {}
    # initial_node_embedding: Linear -> LN -> GELU -> Linear -> LN -> GELU
    p["emb0_w"], p["emb0_b"] = lin(ks[0], n_input_feats, channels)
    p["emb0_g"] = jnp.ones((1, channels), jnp.float32)
    p["emb0_beta"] = jnp.zeros((1, channels), jnp.float32)
    p["emb1_w"], p["emb1_b"] = lin(ks[1], channels, channels)
    p["emb1_g"] = jnp.ones((1, channels), jnp.float32)
    p["emb1_beta"] = jnp.zeros((1, channels), jnp.float32)

    # EGNNConv edge_mlp: in = 2*C + 1 (radial) + edge_feat_dim.  Init the full
    # matrix (PyTorch fan_in bound) then split for concat-free kernel matmuls.
    ein = 2 * channels + 1 + edge_feat_dim
    e_w1, p["e_b1"] = lin(ks[2], ein, channels)
    p["e_w1_src"] = e_w1[:channels]
    p["e_w1_dst"] = e_w1[channels:2 * channels]
    p["e_w1_rad"] = e_w1[2 * channels:2 * channels + 1]
    p["e_w1_edge"] = e_w1[2 * channels + 1:]
    p["e_w2"], p["e_b2"] = lin(ks[3], channels, channels)

    # EGNNConv node_mlp: in = C (h) + C (h_neigh)  -> split the same way
    n_w1, p["n_b1"] = lin(ks[4], 2 * channels, channels)
    p["n_w1_h"] = n_w1[:channels]
    p["n_w1_nb"] = n_w1[channels:]
    p["n_w2"], p["n_b2"] = lin(ks[5], channels, channels)

    # mu / logvar heads
    p["mu_w"], p["mu_b"] = lin(ks[6], channels, latent)
    p["lv_w"], p["lv_b"] = lin(ks[7], channels, latent)
    return p


if __name__ == "__main__":
    N, E = 16, 48
    n_input_feats, channels, latent, edge_feat_dim = 16, 32, 16, 7

    key = jax.random.PRNGKey(0)
    kp, kn, ke, kx, ks, kd, keps = jax.random.split(key, 7)

    params = init_params(kp, n_input_feats, channels, latent, edge_feat_dim)
    node_attr = jax.random.normal(kn, (N, n_input_feats), jnp.float32)   # G.ndata['attr']
    edge_attr = jax.random.normal(ke, (E, edge_feat_dim), jnp.float32)   # G.edata['attr']
    xyz = jax.random.normal(kx, (N, 3), jnp.float32)                     # G.ndata['xyz']
    src = jax.random.randint(ks, (E,), 0, N)                             # graph edges (src)
    dst = jax.random.randint(kd, (E,), 0, N)                             # graph edges (dst)
    eps = jax.random.uniform(keps, (N, latent), jnp.float32)             # torch.rand_like

    z, mu, logvar = jax.jit(encoder_forward)(params, node_attr, edge_attr, xyz, src, dst, eps)
    jax.block_until_ready((z, mu, logvar))

    assert z.shape == (N, latent) and mu.shape == (N, latent) and logvar.shape == (N, latent)
    assert jnp.all(jnp.isfinite(z)) and jnp.all(jnp.isfinite(mu)) and jnp.all(jnp.isfinite(logvar))
    print("KERNEL_OK")
</pallas_src>

<mosaic_0001>
module attributes {stable_mosaic.version = 11 : i64} {
  func.func @encoder_fused_kernel(%arg0: memref<16x16xf32, #tpu.memory_space<vmem>>, %arg1: memref<48x7xf32, #tpu.memory_space<vmem>>, %arg2: memref<16x3xf32, #tpu.memory_space<vmem>>, %arg3: memref<48x1xi32, #tpu.memory_space<vmem>>, %arg4: memref<48x1xi32, #tpu.memory_space<vmem>>, %arg5: memref<1x48xi32, #tpu.memory_space<vmem>>, %arg6: memref<16x32xf32, #tpu.memory_space<vmem>>, %arg7: memref<1x32xf32, #tpu.memory_space<vmem>>, %arg8: memref<1x32xf32, #tpu.memory_space<vmem>>, %arg9: memref<1x32xf32, #tpu.memory_space<vmem>>, %arg10: memref<32x32xf32, #tpu.memory_space<vmem>>, %arg11: memref<1x32xf32, #tpu.memory_space<vmem>>, %arg12: memref<1x32xf32, #tpu.memory_space<vmem>>, %arg13: memref<1x32xf32, #tpu.memory_space<vmem>>, %arg14: memref<32x32xf32, #tpu.memory_space<vmem>>, %arg15: memref<32x32xf32, #tpu.memory_space<vmem>>, %arg16: memref<1x32xf32, #tpu.memory_space<vmem>>, %arg17: memref<7x32xf32, #tpu.memory_space<vmem>>, %arg18: memref<1x32xf32, #tpu.memory_space<vmem>>, %arg19: memref<32x32xf32, #tpu.memory_space<vmem>>, %arg20: memref<1x32xf32, #tpu.memory_space<vmem>>, %arg21: memref<32x32xf32, #tpu.memory_space<vmem>>, %arg22: memref<32x32xf32, #tpu.memory_space<vmem>>, %arg23: memref<1x32xf32, #tpu.memory_space<vmem>>, %arg24: memref<32x32xf32, #tpu.memory_space<vmem>>, %arg25: memref<1x32xf32, #tpu.memory_space<vmem>>, %arg26: memref<32x16xf32, #tpu.memory_space<vmem>>, %arg27: memref<1x16xf32, #tpu.memory_space<vmem>>, %arg28: memref<32x16xf32, #tpu.memory_space<vmem>>, %arg29: memref<1x16xf32, #tpu.memory_space<vmem>>, %arg30: memref<16x16xf32, #tpu.memory_space<vmem>>, %arg31: memref<16x16xf32, #tpu.memory_space<vmem>>, %arg32: memref<16x16xf32, #tpu.memory_space<vmem>>, %arg33: memref<16x16xf32, #tpu.memory_space<vmem>>) attributes {dimension_semantics = [], scalar_prefetch = 0 : i64, scratch_operands = 0 : i64, tpu.core_type = #tpu.core_type<tc>} {
    %c0 = arith.constant 0 : index
    %c0_0 = arith.constant 0 : index
    %0 = vector.load %arg0[%c0, %c0_0] : memref<16x16xf32, #tpu.memory_space<vmem>>, vector<16x16xf32>
    %c0_1 = arith.constant 0 : index
    %c0_2 = arith.constant 0 : index
    %1 = vector.load %arg6[%c0_1, %c0_2] : memref<16x32xf32, #tpu.memory_space<vmem>>, vector<16x32xf32>
    %2 = arith.truncf %0 : vector<16x16xf32> to vector<16x16xbf16>
    %3 = arith.truncf %1 : vector<16x32xf32> to vector<16x32xbf16>
    %cst = arith.constant dense<0.000000e+00> : vector<16x32xf32>
    %4 = tpu.matmul %2, %3, %cst {dimension_numbers = #tpu.dot_dimension_numbers<[1], [0], [0], [1], [0, 0, 1, 1], [], []>} : vector<16x16xbf16>, vector<16x32xbf16>, vector<16x32xf32> -> vector<16x32xf32>
    %c0_3 = arith.constant 0 : index
    %c0_4 = arith.constant 0 : index
    %5 = vector.load %arg7[%c0_3, %c0_4] : memref<1x32xf32, #tpu.memory_space<vmem>>, vector<1x32xf32>
    %6 = vector.broadcast %5 : vector<1x32xf32> to vector<16x32xf32>
    %7 = arith.addf %4, %6 : vector<16x32xf32>
    %c0_5 = arith.constant 0 : index
    %c0_6 = arith.constant 0 : index
    %8 = vector.load %arg8[%c0_5, %c0_6] : memref<1x32xf32, #tpu.memory_space<vmem>>, vector<1x32xf32>
    %c0_7 = arith.constant 0 : index
    %c0_8 = arith.constant 0 : index
    %9 = vector.load %arg9[%c0_7, %c0_8] : memref<1x32xf32, #tpu.memory_space<vmem>>, vector<1x32xf32>
    %cst_9 = arith.constant dense<0.000000e+00> : vector<16xf32>
    %10 = vector.multi_reduction <add>, %7, %cst_9 [1] : vector<16x32xf32> to vector<16xf32>
    %11 = vector.shape_cast %10 : vector<16xf32> to vector<16x1xf32>
    %cst_10 = arith.constant 3.200000e+01 : f32
    %12 = vector.broadcast %cst_10 : f32 to vector<16x1xf32>
    %13 = arith.divf %11, %12 : vector<16x1xf32>
    %14 = vector.broadcast %13 : vector<16x1xf32> to vector<16x32xf32>
    %15 = arith.subf %7, %14 : vector<16x32xf32>
    %16 = arith.mulf %15, %15 : vector<16x32xf32>
    %cst_11 = arith.constant dense<0.000000e+00> : vector<16xf32>
    %17 = vector.multi_reduction <add>, %16, %cst_11 [1] : vector<16x32xf32> to vector<16xf32>
    %18 = vector.shape_cast %17 : vector<16xf32> to vector<16x1xf32>
    %cst_12 = arith.constant 3.200000e+01 : f32
    %19 = vector.broadcast %cst_12 : f32 to vector<16x1xf32>
    %20 = arith.divf %18, %19 : vector<16x1xf32>
    %21 = vector.broadcast %13 : vector<16x1xf32> to vector<16x32xf32>
    %22 = arith.subf %7, %21 : vector<16x32xf32>
    %cst_13 = arith.constant 9.99999974E-6 : f32
    %23 = vector.broadcast %cst_13 : f32 to vector<16x1xf32>
    %24 = arith.addf %20, %23 : vector<16x1xf32>
    %25 = math.rsqrt %24 : vector<16x1xf32>
    %26 = vector.broadcast %25 : vector<16x1xf32> to vector<16x32xf32>
    %27 = arith.mulf %22, %26 : vector<16x32xf32>
    %28 = vector.broadcast %8 : vector<1x32xf32> to vector<16x32xf32>
    %29 = arith.mulf %27, %28 : vector<16x32xf32>
    %30 = vector.broadcast %9 : vector<1x32xf32> to vector<16x32xf32>
    %31 = arith.addf %29, %30 : vector<16x32xf32>
    %cst_14 = arith.constant 5.000000e-01 : f32
    %32 = vector.broadcast %cst_14 : f32 to vector<16x32xf32>
    %33 = arith.mulf %32, %31 : vector<16x32xf32>
    %cst_15 = arith.constant 1.41421354 : f32
    %34 = vector.broadcast %cst_15 : f32 to vector<16x32xf32>
    %35 = arith.divf %31, %34 : vector<16x32xf32>
    %36 = math.erf %35 : vector<16x32xf32>
    %cst_16 = arith.constant 1.000000e+00 : f32
    %37 = vector.broadcast %cst_16 : f32 to vector<16x32xf32>
    %38 = arith.addf %37, %36 : vector<16x32xf32>
    %39 = arith.mulf %33, %38 : vector<16x32xf32>
    %c0_17 = arith.constant 0 : index
    %c0_18 = arith.constant 0 : index
    %40 = vector.load %arg10[%c0_17, %c0_18] : memref<32x32xf32, #tpu.memory_space<vmem>>, vector<32x32xf32>
    %41 = arith.truncf %39 : vector<16x32xf32> to vector<16x32xbf16>
    %42 = arith.truncf %40 : vector<32x32xf32> to vector<32x32xbf16>
    %cst_19 = arith.constant dense<0.000000e+00> : vector<16x32xf32>
    %43 = tpu.matmul %41, %42, %cst_19 {dimension_numbers = #tpu.dot_dimension_numbers<[1], [0], [0], [1], [0, 0, 1, 1], [], []>} : vector<16x32xbf16>, vector<32x32xbf16>, vector<16x32xf32> -> vector<16x32xf32>
    %c0_20 = arith.constant 0 : index
    %c0_21 = arith.constant 0 : index
    %44 = vector.load %arg11[%c0_20, %c0_21] : memref<1x32xf32, #tpu.memory_space<vmem>>, vector<1x32xf32>
    %45 = vector.broadcast %44 : vector<1x32xf32> to vector<16x32xf32>
    %46 = arith.addf %43, %45 : vector<16x32xf32>
    %c0_22 = arith.constant 0 : index
    %c0_23 = arith.constant 0 : index
    %47 = vector.load %arg12[%c0_22, %c0_23] : memref<1x32xf32, #tpu.memory_space<vmem>>, vector<1x32xf32>
    %c0_24 = arith.constant 0 : index
    %c0_25 = arith.constant 0 : index
    %48 = vector.load %arg13[%c0_24, %c0_25] : memref<1x32xf32, #tpu.memory_space<vmem>>, vector<1x32xf32>
    %cst_26 = arith.constant dense<0.000000e+00> : vector<16xf32>
    %49 = vector.multi_reduction <add>, %46, %cst_26 [1] : vector<16x32xf32> to vector<16xf32>
    %50 = vector.shape_cast %49 : vector<16xf32> to vector<16x1xf32>
    %cst_27 = arith.constant 3.200000e+01 : f32
    %51 = vector.broadcast %cst_27 : f32 to vector<16x1xf32>
    %52 = arith.divf %50, %51 : vector<16x1xf32>
    %53 = vector.broadcast %52 : vector<16x1xf32> to vector<16x32xf32>
    %54 = arith.subf %46, %53 : vector<16x32xf32>
    %55 = arith.mulf %54, %54 : vector<16x32xf32>
    %cst_28 = arith.constant dense<0.000000e+00> : vector<16xf32>
    %56 = vector.multi_reduction <add>, %55, %cst_28 [1] : vector<16x32xf32> to vector<16xf32>
    %57 = vector.shape_cast %56 : vector<16xf32> to vector<16x1xf32>
    %cst_29 = arith.constant 3.200000e+01 : f32
    %58 = vector.broadcast %cst_29 : f32 to vector<16x1xf32>
    %59 = arith.divf %57, %58 : vector<16x1xf32>
    %60 = vector.broadcast %52 : vector<16x1xf32> to vector<16x32xf32>
    %61 = arith.subf %46, %60 : vector<16x32xf32>
    %cst_30 = arith.constant 9.99999974E-6 : f32
    %62 = vector.broadcast %cst_30 : f32 to vector<16x1xf32>
    %63 = arith.addf %59, %62 : vector<16x1xf32>
    %64 = math.rsqrt %63 : vector<16x1xf32>
    %65 = vector.broadcast %64 : vector<16x1xf32> to vector<16x32xf32>
    %66 = arith.mulf %61, %65 : vector<16x32xf32>
    %67 = vector.broadcast %47 : vector<1x32xf32> to vector<16x32xf32>
    %68 = arith.mulf %66, %67 : vector<16x32xf32>
    %69 = vector.broadcast %48 : vector<1x32xf32> to vector<16x32xf32>
    %70 = arith.addf %68, %69 : vector<16x32xf32>
    %cst_31 = arith.constant 5.000000e-01 : f32
    %71 = vector.broadcast %cst_31 : f32 to vector<16x32xf32>
    %72 = arith.mulf %71, %70 : vector<16x32xf32>
    %cst_32 = arith.constant 1.41421354 : f32
    %73 = vector.broadcast %cst_32 : f32 to vector<16x32xf32>
    %74 = arith.divf %70, %73 : vector<16x32xf32>
    %75 = math.erf %74 : vector<16x32xf32>
    %cst_33 = arith.constant 1.000000e+00 : f32
    %76 = vector.broadcast %cst_33 : f32 to vector<16x32xf32>
    %77 = arith.addf %76, %75 : vector<16x32xf32>
    %78 = arith.mulf %72, %77 : vector<16x32xf32>
    %79 = tpu.iota {dimensions = array<i32: 1>} : vector<48x16xi32>
    %c0_34 = arith.constant 0 : index
    %c0_35 = arith.constant 0 : index
    %80 = vector.load %arg3[%c0_34, %c0_35] : memref<48x1xi32, #tpu.memory_space<vmem>>, vector<48x1xi32>
    %81 = vector.broadcast %80 : vector<48x1xi32> to vector<48x16xi32>
    %82 = arith.cmpi eq, %79, %81 : vector<48x16xi32>
    %83 = arith.extui %82 : vector<48x16xi1> to vector<48x16xi32>
    %84 = arith.sitofp %83 : vector<48x16xi32> to vector<48x16xf32>
    %c0_36 = arith.constant 0 : index
    %c0_37 = arith.constant 0 : index
    %85 = vector.load %arg4[%c0_36, %c0_37] : memref<48x1xi32, #tpu.memory_space<vmem>>, vector<48x1xi32>
    %86 = vector.broadcast %85 : vector<48x1xi32> to vector<48x16xi32>
    %87 = arith.cmpi eq, %79, %86 : vector<48x16xi32>
    %88 = arith.extui %87 : vector<48x16xi1> to vector<48x16xi32>
    %89 = arith.sitofp %88 : vector<48x16xi32> to vector<48x16xf32>
    %90 = arith.truncf %84 : vector<48x16xf32> to vector<48x16xbf16>
    %91 = arith.truncf %78 : vector<16x32xf32> to vector<16x32xbf16>
    %cst_38 = arith.constant dense<0.000000e+00> : vector<48x32xf32>
    %92 = tpu.matmul %90, %91, %cst_38 {dimension_numbers = #tpu.dot_dimension_numbers<[1], [0], [0], [1], [0, 0, 1, 1], [], []>} : vector<48x16xbf16>, vector<16x32xbf16>, vector<48x32xf32> -> vector<48x32xf32>
    %93 = arith.truncf %89 : vector<48x16xf32> to vector<48x16xbf16>
    %94 = arith.truncf %78 : vector<16x32xf32> to vector<16x32xbf16>
    %cst_39 = arith.constant dense<0.000000e+00> : vector<48x32xf32>
    %95 = tpu.matmul %93, %94, %cst_39 {dimension_numbers = #tpu.dot_dimension_numbers<[1], [0], [0], [1], [0, 0, 1, 1], [], []>} : vector<48x16xbf16>, vector<16x32xbf16>, vector<48x32xf32> -> vector<48x32xf32>
    %96 = arith.subf %84, %89 : vector<48x16xf32>
    %c0_40 = arith.constant 0 : index
    %c0_41 = arith.constant 0 : index
    %97 = vector.load %arg2[%c0_40, %c0_41] : memref<16x3xf32, #tpu.memory_space<vmem>>, vector<16x3xf32>
    %cst_42 = arith.constant dense<0.000000e+00> : vector<48x3xf32>
    %98 = tpu.matmul %96, %97, %cst_42 {dimension_numbers = #tpu.dot_dimension_numbers<[1], [0], [0], [1], [0, 0, 1, 1], [], []>} : vector<48x16xf32>, vector<16x3xf32>, vector<48x3xf32> -> vector<48x3xf32>
    %99 = arith.mulf %98, %98 : vector<48x3xf32>
    %cst_43 = arith.constant dense<0.000000e+00> : vector<48xf32>
    %100 = vector.multi_reduction <add>, %99, %cst_43 [1] : vector<48x3xf32> to vector<48xf32>
    %101 = vector.shape_cast %100 : vector<48xf32> to vector<48x1xf32>
    %c0_44 = arith.constant 0 : index
    %c0_45 = arith.constant 0 : index
    %102 = vector.load %arg14[%c0_44, %c0_45] : memref<32x32xf32, #tpu.memory_space<vmem>>, vector<32x32xf32>
    %103 = arith.truncf %92 : vector<48x32xf32> to vector<48x32xbf16>
    %104 = arith.truncf %102 : vector<32x32xf32> to vector<32x32xbf16>
    %cst_46 = arith.constant dense<0.000000e+00> : vector<48x32xf32>
    %105 = tpu.matmul %103, %104, %cst_46 {dimension_numbers = #tpu.dot_dimension_numbers<[1], [0], [0], [1], [0, 0, 1, 1], [], []>} : vector<48x32xbf16>, vector<32x32xbf16>, vector<48x32xf32> -> vector<48x32xf32>
    %c0_47 = arith.constant 0 : index
    %c0_48 = arith.constant 0 : index
    %106 = vector.load %arg15[%c0_47, %c0_48] : memref<32x32xf32, #tpu.memory_space<vmem>>, vector<32x32xf32>
    %107 = arith.truncf %95 : vector<48x32xf32> to vector<48x32xbf16>
    %108 = arith.truncf %106 : vector<32x32xf32> to vector<32x32xbf16>
    %cst_49 = arith.constant dense<0.000000e+00> : vector<48x32xf32>
    %109 = tpu.matmul %107, %108, %cst_49 {dimension_numbers = #tpu.dot_dimension_numbers<[1], [0], [0], [1], [0, 0, 1, 1], [], []>} : vector<48x32xbf16>, vector<32x32xbf16>, vector<48x32xf32> -> vector<48x32xf32>
    %110 = arith.addf %105, %109 : vector<48x32xf32>
    %c0_50 = arith.constant 0 : index
    %c0_51 = arith.constant 0 : index
    %111 = vector.load %arg16[%c0_50, %c0_51] : memref<1x32xf32, #tpu.memory_space<vmem>>, vector<1x32xf32>
    %112 = vector.broadcast %101 : vector<48x1xf32> to vector<48x32xf32>
    %113 = vector.broadcast %111 : vector<1x32xf32> to vector<48x32xf32>
    %114 = arith.mulf %112, %113 : vector<48x32xf32>
    %115 = arith.addf %110, %114 : vector<48x32xf32>
    %c0_52 = arith.constant 0 : index
    %c0_53 = arith.constant 0 : index
    %116 = vector.load %arg1[%c0_52, %c0_53] : memref<48x7xf32, #tpu.memory_space<vmem>>, vector<48x7xf32>
    %c0_54 = arith.constant 0 : index
    %c0_55 = arith.constant 0 : index
    %117 = vector.load %arg17[%c0_54, %c0_55] : memref<7x32xf32, #tpu.memory_space<vmem>>, vector<7x32xf32>
    %118 = arith.truncf %116 : vector<48x7xf32> to vector<48x7xbf16>
    %119 = arith.truncf %117 : vector<7x32xf32> to vector<7x32xbf16>
    %cst_56 = arith.constant dense<0.000000e+00> : vector<48x32xf32>
    %120 = tpu.matmul %118, %119, %cst_56 {dimension_numbers = #tpu.dot_dimension_numbers<[1], [0], [0], [1], [0, 0, 1, 1], [], []>} : vector<48x7xbf16>, vector<7x32xbf16>, vector<48x32xf32> -> vector<48x32xf32>
    %121 = arith.addf %115, %120 : vector<48x32xf32>
    %c0_57 = arith.constant 0 : index
    %c0_58 = arith.constant 0 : index
    %122 = vector.load %arg18[%c0_57, %c0_58] : memref<1x32xf32, #tpu.memory_space<vmem>>, vector<1x32xf32>
    %123 = vector.broadcast %122 : vector<1x32xf32> to vector<48x32xf32>
    %124 = arith.addf %121, %123 : vector<48x32xf32>
    %125 = arith.negf %124 : vector<48x32xf32>
    %126 = math.exp %125 : vector<48x32xf32>
    %cst_59 = arith.constant 1.000000e+00 : f32
    %127 = vector.broadcast %cst_59 : f32 to vector<48x32xf32>
    %128 = arith.addf %127, %126 : vector<48x32xf32>
    %129 = arith.divf %127, %128 : vector<48x32xf32>
    %130 = arith.mulf %124, %129 : vector<48x32xf32>
    %c0_60 = arith.constant 0 : index
    %c0_61 = arith.constant 0 : index
    %131 = vector.load %arg19[%c0_60, %c0_61] : memref<32x32xf32, #tpu.memory_space<vmem>>, vector<32x32xf32>
    %132 = arith.truncf %130 : vector<48x32xf32> to vector<48x32xbf16>
    %133 = arith.truncf %131 : vector<32x32xf32> to vector<32x32xbf16>
    %cst_62 = arith.constant dense<0.000000e+00> : vector<48x32xf32>
    %134 = tpu.matmul %132, %133, %cst_62 {dimension_numbers = #tpu.dot_dimension_numbers<[1], [0], [0], [1], [0, 0, 1, 1], [], []>} : vector<48x32xbf16>, vector<32x32xbf16>, vector<48x32xf32> -> vector<48x32xf32>
    %c0_63 = arith.constant 0 : index
    %c0_64 = arith.constant 0 : index
    %135 = vector.load %arg20[%c0_63, %c0_64] : memref<1x32xf32, #tpu.memory_space<vmem>>, vector<1x32xf32>
    %136 = vector.broadcast %135 : vector<1x32xf32> to vector<48x32xf32>
    %137 = arith.addf %134, %136 : vector<48x32xf32>
    %138 = arith.negf %137 : vector<48x32xf32>
    %139 = math.exp %138 : vector<48x32xf32>
    %cst_65 = arith.constant 1.000000e+00 : f32
    %140 = vector.broadcast %cst_65 : f32 to vector<48x32xf32>
    %141 = arith.addf %140, %139 : vector<48x32xf32>
    %142 = arith.divf %140, %141 : vector<48x32xf32>
    %143 = arith.mulf %137, %142 : vector<48x32xf32>
    %144 = tpu.iota {dimensions = array<i32: 0>} : vector<16x48xi32>
    %c0_66 = arith.constant 0 : index
    %c0_67 = arith.constant 0 : index
    %145 = vector.load %arg5[%c0_66, %c0_67] : memref<1x48xi32, #tpu.memory_space<vmem>>, vector<1x48xi32>
    %146 = vector.broadcast %145 : vector<1x48xi32> to vector<16x48xi32>
    %147 = arith.cmpi eq, %144, %146 : vector<16x48xi32>
    %148 = arith.extui %147 : vector<16x48xi1> to vector<16x48xi32>
    %149 = arith.sitofp %148 : vector<16x48xi32> to vector<16x48xf32>
    %150 = arith.truncf %149 : vector<16x48xf32> to vector<16x48xbf16>
    %151 = arith.truncf %143 : vector<48x32xf32> to vector<48x32xbf16>
    %cst_68 = arith.constant dense<0.000000e+00> : vector<16x32xf32>
    %152 = tpu.matmul %150, %151, %cst_68 {dimension_numbers = #tpu.dot_dimension_numbers<[1], [0], [0], [1], [0, 0, 1, 1], [], []>} : vector<16x48xbf16>, vector<48x32xbf16>, vector<16x32xf32> -> vector<16x32xf32>
    %c0_69 = arith.constant 0 : index
    %c0_70 = arith.constant 0 : index
    %153 = vector.load %arg21[%c0_69, %c0_70] : memref<32x32xf32, #tpu.memory_space<vmem>>, vector<32x32xf32>
    %154 = arith.truncf %78 : vector<16x32xf32> to vector<16x32xbf16>
    %155 = arith.truncf %153 : vector<32x32xf32> to vector<32x32xbf16>
    %cst_71 = arith.constant dense<0.000000e+00> : vector<16x32xf32>
    %156 = tpu.matmul %154, %155, %cst_71 {dimension_numbers = #tpu.dot_dimension_numbers<[1], [0], [0], [1], [0, 0, 1, 1], [], []>} : vector<16x32xbf16>, vector<32x32xbf16>, vector<16x32xf32> -> vector<16x32xf32>
    %c0_72 = arith.constant 0 : index
    %c0_73 = arith.constant 0 : index
    %157 = vector.load %arg22[%c0_72, %c0_73] : memref<32x32xf32, #tpu.memory_space<vmem>>, vector<32x32xf32>
    %158 = arith.truncf %152 : vector<16x32xf32> to vector<16x32xbf16>
    %159 = arith.truncf %157 : vector<32x32xf32> to vector<32x32xbf16>
    %cst_74 = arith.constant dense<0.000000e+00> : vector<16x32xf32>
    %160 = tpu.matmul %158, %159, %cst_74 {dimension_numbers = #tpu.dot_dimension_numbers<[1], [0], [0], [1], [0, 0, 1, 1], [], []>} : vector<16x32xbf16>, vector<32x32xbf16>, vector<16x32xf32> -> vector<16x32xf32>
    %161 = arith.addf %156, %160 : vector<16x32xf32>
    %c0_75 = arith.constant 0 : index
    %c0_76 = arith.constant 0 : index
    %162 = vector.load %arg23[%c0_75, %c0_76] : memref<1x32xf32, #tpu.memory_space<vmem>>, vector<1x32xf32>
    %163 = vector.broadcast %162 : vector<1x32xf32> to vector<16x32xf32>
    %164 = arith.addf %161, %163 : vector<16x32xf32>
    %165 = arith.negf %164 : vector<16x32xf32>
    %166 = math.exp %165 : vector<16x32xf32>
    %cst_77 = arith.constant 1.000000e+00 : f32
    %167 = vector.broadcast %cst_77 : f32 to vector<16x32xf32>
    %168 = arith.addf %167, %166 : vector<16x32xf32>
    %169 = arith.divf %167, %168 : vector<16x32xf32>
    %170 = arith.mulf %164, %169 : vector<16x32xf32>
    %c0_78 = arith.constant 0 : index
    %c0_79 = arith.constant 0 : index
    %171 = vector.load %arg24[%c0_78, %c0_79] : memref<32x32xf32, #tpu.memory_space<vmem>>, vector<32x32xf32>
    %172 = arith.truncf %170 : vector<16x32xf32> to vector<16x32xbf16>
    %173 = arith.truncf %171 : vector<32x32xf32> to vector<32x32xbf16>
    %cst_80 = arith.constant dense<0.000000e+00> : vector<16x32xf32>
    %174 = tpu.matmul %172, %173, %cst_80 {dimension_numbers = #tpu.dot_dimension_numbers<[1], [0], [0], [1], [0, 0, 1, 1], [], []>} : vector<16x32xbf16>, vector<32x32xbf16>, vector<16x32xf32> -> vector<16x32xf32>
    %c0_81 = arith.constant 0 : index
    %c0_82 = arith.constant 0 : index
    %175 = vector.load %arg25[%c0_81, %c0_82] : memref<1x32xf32, #tpu.memory_space<vmem>>, vector<1x32xf32>
    %176 = vector.broadcast %175 : vector<1x32xf32> to vector<16x32xf32>
    %177 = arith.addf %174, %176 : vector<16x32xf32>
    %c0_83 = arith.constant 0 : index
    %c0_84 = arith.constant 0 : index
    %178 = vector.load %arg26[%c0_83, %c0_84] : memref<32x16xf32, #tpu.memory_space<vmem>>, vector<32x16xf32>
    %179 = arith.truncf %177 : vector<16x32xf32> to vector<16x32xbf16>
    %180 = arith.truncf %178 : vector<32x16xf32> to vector<32x16xbf16>
    %cst_85 = arith.constant dense<0.000000e+00> : vector<16x16xf32>
    %181 = tpu.matmul %179, %180, %cst_85 {dimension_numbers = #tpu.dot_dimension_numbers<[1], [0], [0], [1], [0, 0, 1, 1], [], []>} : vector<16x32xbf16>, vector<32x16xbf16>, vector<16x16xf32> -> vector<16x16xf32>
    %c0_86 = arith.constant 0 : index
    %c0_87 = arith.constant 0 : index
    %182 = vector.load %arg27[%c0_86, %c0_87] : memref<1x16xf32, #tpu.memory_space<vmem>>, vector<1x16xf32>
    %183 = vector.broadcast %182 : vector<1x16xf32> to vector<16x16xf32>
    %184 = arith.addf %181, %183 : vector<16x16xf32>
    %c0_88 = arith.constant 0 : index
    %c0_89 = arith.constant 0 : index
    %185 = vector.load %arg28[%c0_88, %c0_89] : memref<32x16xf32, #tpu.memory_space<vmem>>, vector<32x16xf32>
    %186 = arith.truncf %177 : vector<16x32xf32> to vector<16x32xbf16>
    %187 = arith.truncf %185 : vector<32x16xf32> to vector<32x16xbf16>
    %cst_90 = arith.constant dense<0.000000e+00> : vector<16x16xf32>
    %188 = tpu.matmul %186, %187, %cst_90 {dimension_numbers = #tpu.dot_dimension_numbers<[1], [0], [0], [1], [0, 0, 1, 1], [], []>} : vector<16x32xbf16>, vector<32x16xbf16>, vector<16x16xf32> -> vector<16x16xf32>
    %c0_91 = arith.constant 0 : index
    %c0_92 = arith.constant 0 : index
    %189 = vector.load %arg29[%c0_91, %c0_92] : memref<1x16xf32, #tpu.memory_space<vmem>>, vector<1x16xf32>
    %190 = vector.broadcast %189 : vector<1x16xf32> to vector<16x16xf32>
    %191 = arith.addf %188, %190 : vector<16x16xf32>
    %c0_93 = arith.constant 0 : index
    %c0_94 = arith.constant 0 : index
    %192 = vector.load %arg30[%c0_93, %c0_94] : memref<16x16xf32, #tpu.memory_space<vmem>>, vector<16x16xf32>
    %193 = math.exp %191 : vector<16x16xf32>
    %194 = arith.mulf %192, %193 : vector<16x16xf32>
    %195 = arith.addf %194, %184 : vector<16x16xf32>
    %c0_95 = arith.constant 0 : index
    %c0_96 = arith.constant 0 : index
    %196 = vector.load %arg31[%c0_95, %c0_96] : memref<16x16xf32, #tpu.memory_space<vmem>>, vector<16x16xf32>
    tpu.vector_store %arg31[%c0_95, %c0_96], %195 {strides = array<i32>} : memref<16x16xf32, #tpu.memory_space<vmem>>, vector<16x16xf32>,
    %c0_97 = arith.constant 0 : index
    %c0_98 = arith.constant 0 : index
    %197 = vector.load %arg32[%c0_97, %c0_98] : memref<16x16xf32, #tpu.memory_space<vmem>>, vector<16x16xf32>
    tpu.vector_store %arg32[%c0_97, %c0_98], %184 {strides = array<i32>} : memref<16x16xf32, #tpu.memory_space<vmem>>, vector<16x16xf32>,
    %c0_99 = arith.constant 0 : index
    %c0_100 = arith.constant 0 : index
    %198 = vector.load %arg33[%c0_99, %c0_100] : memref<16x16xf32, #tpu.memory_space<vmem>>, vector<16x16xf32>
    tpu.vector_store %arg33[%c0_99, %c0_100], %191 {strides = array<i32>} : memref<16x16xf32, #tpu.memory_space<vmem>>, vector<16x16xf32>,
    return
  }
}

</mosaic_0001>

<llo_original>
// kernel: encoder_forward.1
$region0: #{encoder_forward.1}
  #allocation0 [shape = 'u32[]', space=smem, size = 0x4, offset = 0x4, fixed_abs, tag = 'smem constant byte address 0x4 - core index']
  #allocation1 [shape = 'u32[72,128]{1,0:T(1,128)}', space=vmem, size = 0x9000, scoped, tag = 'internal scratch']
  %s0 = inlined_call_operand.smem [shape: u32[34], index: -1, kind: input, shape index: {}]
  %s1 = sld [smem:[%s0]]
  %s2 = scalar_lea.smem %s0, 1
  %s3 = sld [smem:[%s2]]
  %s4 = scalar_lea.smem %s0, 2
  %s5 = sld [smem:[%s4]]
  %s6 = scalar_lea.smem %s0, 3
  %s7 = sld [smem:[%s6]]
  %s8 = scalar_lea.smem %s0, 4
  %s9 = sld [smem:[%s8]]
  %s10 = scalar_lea.smem %s0, 5
  %s11 = sld [smem:[%s10]]
  %s12 = scalar_lea.smem %s0, 6
  %s13 = sld [smem:[%s12]]
  %s14 = scalar_lea.smem %s0, 7
  %s15 = sld [smem:[%s14]]
  %s16 = scalar_lea.smem %s0, 8
  %s17 = sld [smem:[%s16]]
  %s18 = scalar_lea.smem %s0, 9
  %s19 = sld [smem:[%s18]]
  %s20 = scalar_lea.smem %s0, 10
  %s21 = sld [smem:[%s20]]
  %s22 = scalar_lea.smem %s0, 11
  %s23 = sld [smem:[%s22]]
  %s24 = scalar_lea.smem %s0, 12
  %s25 = sld [smem:[%s24]]
  %s26 = scalar_lea.smem %s0, 13
  %s27 = sld [smem:[%s26]]
  %s28 = scalar_lea.smem %s0, 14
  %s29 = sld [smem:[%s28]]
  %s30 = scalar_lea.smem %s0, 15
  %s31 = sld [smem:[%s30]]
  %s32 = scalar_lea.smem %s0, 16
  %s33 = sld [smem:[%s32]]
  %s34 = scalar_lea.smem %s0, 17
  %s35 = sld [smem:[%s34]]
  %s36 = scalar_lea.smem %s0, 18
  %s37 = sld [smem:[%s36]]
  %s38 = scalar_lea.smem %s0, 19
  %s39 = sld [smem:[%s38]]
  %s40 = scalar_lea.smem %s0, 20
  %s41 = sld [smem:[%s40]]
  %s42 = scalar_lea.smem %s0, 21
  %s43 = sld [smem:[%s42]]
  %s44 = scalar_lea.smem %s0, 22
  %s45 = sld [smem:[%s44]]
  %s46 = scalar_lea.smem %s0, 23
  %s47 = sld [smem:[%s46]]
  %s48 = scalar_lea.smem %s0, 24
  %s49 = sld [smem:[%s48]]
  %s50 = scalar_lea.smem %s0, 25
  %s51 = sld [smem:[%s50]]
  %s52 = scalar_lea.smem %s0, 26
  %s53 = sld [smem:[%s52]]
  %s54 = scalar_lea.smem %s0, 27
  %s55 = sld [smem:[%s54]]
  %s56 = scalar_lea.smem %s0, 28
  %s57 = sld [smem:[%s56]]
  %s58 = scalar_lea.smem %s0, 29
  %s59 = sld [smem:[%s58]]
  %s60 = scalar_lea.smem %s0, 30
  %s61 = sld [smem:[%s60]]
  %s62 = scalar_lea.smem %s0, 31
  %s63 = sld [smem:[%s62]]
  %s64 = scalar_lea.smem %s0, 32
  %s65 = sld [smem:[%s64]]
  %s66 = scalar_lea.smem %s0, 33
  %s67 = sld [smem:[%s66]]
  %68 = xla_tuple %s63, %s65, %s67
  %s69 = sld [smem:[#allocation0]]
  $region186: #{encoder_forward.1} parent=0
    _
  %s71 = ssub.s32 1, %s69
  %s72 = scalar_select 0, %s71, %s69
  $region1: #{encoder_forward.1} parent=0
    #allocation2 [shape = 'u8[8192]{0}', space=vmem, size = 0x2000, scoped, tag = 'input window, operand 6, single buffered']
    #allocation3 [shape = 's32[1]{0}', space=sflag, size = 0x4, scoped, tag = 'scoped memory for encoder_forward.1']
    #allocation4 [shape = 's32[1]{0}', space=sflag, size = 0x4, scoped, tag = 'scoped memory for encoder_forward.1']
    #allocation5 [shape = 'u8[4096]{0}', space=vmem, size = 0x1000, scoped, tag = 'input window, operand 17, single buffered']
    #allocation6 [shape = 's32[1]{0}', space=sflag, size = 0x4, scoped, tag = 'scoped memory for encoder_forward.1']
    #allocation7 [shape = 'u8[512]{0}', space=vmem, size = 0x400, scoped, tag = 'input window, operand 18, single buffered']
    #allocation8 [shape = 'u8[512]{0}', space=vmem, size = 0x400, scoped, tag = 'input window, operand 20, single buffered']
    #allocation9 [shape = 's32[1]{0}', space=sflag, size = 0x4, scoped, tag = 'scoped memory for encoder_forward.1']
    #allocation10 [shape = 'u8[512]{0}', space=vmem, size = 0x400, scoped, tag = 'input window, operand 23, single buffered']
    #allocation11 [shape = 'u8[512]{0}', space=vmem, size = 0x400, scoped, tag = 'input window, operand 25, single buffered']
    #allocation12 [shape = 's32[1]{0}', space=sflag, size = 0x4, scoped, tag = 'scoped memory for encoder_forward.1']
    #allocation13 [shape = 'u8[512]{0}', space=vmem, size = 0x400, scoped, tag = 'input window, operand 27, single buffered']
    #allocation14 [shape = 'u8[512]{0}', space=vmem, size = 0x400, scoped, tag = 'input window, operand 29, single buffered']
    #allocation15 [shape = 's32[1]{0}', space=sflag, size = 0x4, scoped, tag = 'scoped memory for encoder_forward.1']
    #allocation16 [shape = 'u8[8192]{0}', space=vmem, size = 0x2000, scoped, tag = 'input window, operand 30, single buffered']
    #allocation17 [shape = 'u8[8192]{0}', space=vmem, size = 0x2000, scoped, tag = 'output window, operand 0, single buffered']
    #allocation18 [shape = 'u8[8192]{0}', space=vmem, size = 0x2000, scoped, tag = 'output window, operand 1, single buffered']
    #allocation19 [shape = 's32[1]{0}', space=sflag, size = 0x4, scoped, tag = 'scoped memory for encoder_forward.1']
    #allocation20 [shape = 'u8[8192]{0}', space=vmem, size = 0x2000, scoped, tag = 'output window, operand 2, single buffered']
    %73 = vsyncpa [#allocation3], 0
    %74 = vsyncpa [#allocation6], 0
    %75 = vsyncpa [#allocation9], 0
    %76 = vsyncpa [#allocation12], 0
    %77 = vsyncpa [#allocation15], 0
    %78 = vsyncpa [#allocation4], 0
    %79 = vsyncpa [#allocation19], 0
    // Predicated region
    $region2: #{encoder_forward.1} parent=1 // pred_check
      _
    $region3: #{encoder_forward.1} parent=1 // pred_check_branch
      %81 = sbr.rel (0) target = $region5
    $region4: #{encoder_forward.1} parent=1 // pred_region
      _
    $region5: #{encoder_forward.1} parent=1 // pred_fallthru
      _
    // Predicated region
    $region6: #{encoder_forward.1} parent=1 // pred_check
      _
    $region7: #{encoder_forward.1} parent=1 // pred_check_branch
      %83 = sbr.rel (0) target = $region9
    $region8: #{encoder_forward.1} parent=1 // pred_region
      _
    $region9: #{encoder_forward.1} parent=1 // pred_fallthru
      _
    // Predicated region
    $region10: #{encoder_forward.1} parent=1 // pred_check
      _
    $region11: #{encoder_forward.1} parent=1 // pred_check_branch
      %85 = sbr.rel (0) target = $region13
    $region12: #{encoder_forward.1} parent=1 // pred_region
      _
    $region13: #{encoder_forward.1} parent=1 // pred_fallthru
      _
    // Predicated region
    $region14: #{encoder_forward.1} parent=1 // pred_check
      _
    $region15: #{encoder_forward.1} parent=1 // pred_check_branch
      %87 = sbr.rel (0) target = $region17
    $region16: #{encoder_forward.1} parent=1 // pred_region
      _
    $region17: #{encoder_forward.1} parent=1 // pred_fallthru
      _
    // Predicated region
    $region18: #{encoder_forward.1} parent=1 // pred_check
      _
    $region19: #{encoder_forward.1} parent=1 // pred_check_branch
      %89 = sbr.rel (0) target = $region21
    $region20: #{encoder_forward.1} parent=1 // pred_region
      _
    $region21: #{encoder_forward.1} parent=1 // pred_fallthru
      _
    // Predicated region
    $region22: #{encoder_forward.1} parent=1 // pred_check
      _
    $region23: #{encoder_forward.1} parent=1 // pred_check_branch
      %91 = sbr.rel (0) target = $region25
    $region24: #{encoder_forward.1} parent=1 // pred_region
      _
    $region25: #{encoder_forward.1} parent=1 // pred_fallthru
      _
    // Predicated region
    $region26: #{encoder_forward.1} parent=1 // pred_check
      _
    $region27: #{encoder_forward.1} parent=1 // pred_check_branch
      %93 = sbr.rel (0) target = $region29
    $region28: #{encoder_forward.1} parent=1 // pred_region
      %95 = vsyncadd [#allocation3], 0
      %s96 = sshll.u32 %s13, 4
      %s97 = int_to_ptr.hbm [resolvable:$true] %s96
      %s98 = sshll.u32 [#allocation2], 4
      %s99 = int_to_ptr.vmem [resolvable:$true] %s98
      %104 = dma.hbm_to_vmem [thread:$0]  %s97, 256, %s99, [#allocation3], 128, 128, 8
    $region29: #{encoder_forward.1} parent=1 // pred_fallthru
      _
    // Predicated region
    $region30: #{encoder_forward.1} parent=1 // pred_check
      _
    $region31: #{encoder_forward.1} parent=1 // pred_check_branch
      %106 = sbr.rel (0) target = $region33
    $region32: #{encoder_forward.1} parent=1 // pred_region
      _
    $region33: #{encoder_forward.1} parent=1 // pred_fallthru
      _
    // Predicated region
    $region34: #{encoder_forward.1} parent=1 // pred_check
      _
    $region35: #{encoder_forward.1} parent=1 // pred_check_branch
      %108 = sbr.rel (0) target = $region37
    $region36: #{encoder_forward.1} parent=1 // pred_region
      _
    $region37: #{encoder_forward.1} parent=1 // pred_fallthru
      _
    // Predicated region
    $region38: #{encoder_forward.1} parent=1 // pred_check
      _
    $region39: #{encoder_forward.1} parent=1 // pred_check_branch
      %110 = sbr.rel (0) target = $region41
    $region40: #{encoder_forward.1} parent=1 // pred_region
      _
    $region41: #{encoder_forward.1} parent=1 // pred_fallthru
      _
    // Predicated region
    $region42: #{encoder_forward.1} parent=1 // pred_check
      _
    $region43: #{encoder_forward.1} parent=1 // pred_check_branch
      %112 = sbr.rel (0) target = $region45
    $region44: #{encoder_forward.1} parent=1 // pred_region
      _
    $region45: #{encoder_forward.1} parent=1 // pred_fallthru
      _
    // Predicated region
    $region46: #{encoder_forward.1} parent=1 // pred_check
      _
    $region47: #{encoder_forward.1} parent=1 // pred_check_branch
      %114 = sbr.rel (0) target = $region49
    $region48: #{encoder_forward.1} parent=1 // pred_region
      _
    $region49: #{encoder_forward.1} parent=1 // pred_fallthru
      _
    // Predicated region
    $region50: #{encoder_forward.1} parent=1 // pred_check
      _
    $region51: #{encoder_forward.1} parent=1 // pred_check_branch
      %116 = sbr.rel (0) target = $region53
    $region52: #{encoder_forward.1} parent=1 // pred_region
      _
    $region53: #{encoder_forward.1} parent=1 // pred_fallthru
      _
    // Predicated region
    $region54: #{encoder_forward.1} parent=1 // pred_check
      _
    $region55: #{encoder_forward.1} parent=1 // pred_check_branch
      %118 = sbr.rel (0) target = $region57
    $region56: #{encoder_forward.1} parent=1 // pred_region
      _
    $region57: #{encoder_forward.1} parent=1 // pred_fallthru
      _
    // Predicated region
    $region58: #{encoder_forward.1} parent=1 // pred_check
      _
    $region59: #{encoder_forward.1} parent=1 // pred_check_branch
      %120 = sbr.rel (0) target = $region61
    $region60: #{encoder_forward.1} parent=1 // pred_region
      _
    $region61: #{encoder_forward.1} parent=1 // pred_fallthru
      _
    // Predicated region
    $region62: #{encoder_forward.1} parent=1 // pred_check
      _
    $region63: #{encoder_forward.1} parent=1 // pred_check_branch
      %122 = sbr.rel (0) target = $region65
    $region64: #{encoder_forward.1} parent=1 // pred_region
      _
    $region65: #{encoder_forward.1} parent=1 // pred_fallthru
      _
    // Predicated region
    $region66: #{encoder_forward.1} parent=1 // pred_check
      _
    $region67: #{encoder_forward.1} parent=1 // pred_check_branch
      %124 = sbr.rel (0) target = $region69
    $region68: #{encoder_forward.1} parent=1 // pred_region
      _
    $region69: #{encoder_forward.1} parent=1 // pred_fallthru
      _
    // Predicated region
    $region70: #{encoder_forward.1} parent=1 // pred_check
      _
    $region71: #{encoder_forward.1} parent=1 // pred_check_branch
      %126 = sbr.rel (0) target = $region73
    $region72: #{encoder_forward.1} parent=1 // pred_region
      %128 = vsyncadd [#allocation6], 0
      %s130 = sshll.u32 %s35, 4
      %s131 = int_to_ptr.hbm [resolvable:$true] %s130
      %s132 = sshll.u32 [#allocation5], 4
      %s133 = int_to_ptr.vmem [resolvable:$true] %s132
      %135 = dma.hbm_to_vmem [thread:$0]  %s131, 128, %s133, [#allocation6]
    $region73: #{encoder_forward.1} parent=1 // pred_fallthru
      _
    // Predicated region
    $region74: #{encoder_forward.1} parent=1 // pred_check
      _
    $region75: #{encoder_forward.1} parent=1 // pred_check_branch
      %137 = sbr.rel (0) target = $region77
    $region76: #{encoder_forward.1} parent=1 // pred_region
      %139 = vsyncadd [#allocation6], 0
      %s141 = sshll.u32 %s37, 4
      %s142 = int_to_ptr.hbm [resolvable:$true] %s141
      %s143 = sshll.u32 [#allocation7], 4
      %s144 = int_to_ptr.vmem [resolvable:$true] %s143
      %146 = dma.hbm_to_vmem [thread:$0]  %s142, 16, %s144, [#allocation6]
    $region77: #{encoder_forward.1} parent=1 // pred_fallthru
      _
    // Predicated region
    $region78: #{encoder_forward.1} parent=1 // pred_check
      _
    $region79: #{encoder_forward.1} parent=1 // pred_check_branch
      %148 = sbr.rel (0) target = $region81
    $region80: #{encoder_forward.1} parent=1 // pred_region
      _
    $region81: #{encoder_forward.1} parent=1 // pred_fallthru
      _
    // Predicated region
    $region82: #{encoder_forward.1} parent=1 // pred_check
      _
    $region83: #{encoder_forward.1} parent=1 // pred_check_branch
      %150 = sbr.rel (0) target = $region85
    $region84: #{encoder_forward.1} parent=1 // pred_region
      %152 = vsyncadd [#allocation9], 0
      %s154 = sshll.u32 %s41, 4
      %s155 = int_to_ptr.hbm [resolvable:$true] %s154
      %s156 = sshll.u32 [#allocation8], 4
      %s157 = int_to_ptr.vmem [resolvable:$true] %s156
      %159 = dma.hbm_to_vmem [thread:$0]  %s155, 16, %s157, [#allocation9]
    $region85: #{encoder_forward.1} parent=1 // pred_fallthru
      _
    // Predicated region
    $region86: #{encoder_forward.1} parent=1 // pred_check
      _
    $region87: #{encoder_forward.1} parent=1 // pred_check_branch
      %161 = sbr.rel (0) target = $region89
    $region88: #{encoder_forward.1} parent=1 // pred_region
      _
    $region89: #{encoder_forward.1} parent=1 // pred_fallthru
      _
    // Predicated region
    $region90: #{encoder_forward.1} parent=1 // pred_check
      _
    $region91: #{encoder_forward.1} parent=1 // pred_check_branch
      %163 = sbr.rel (0) target = $region93
    $region92: #{encoder_forward.1} parent=1 // pred_region
      _
    $region93: #{encoder_forward.1} parent=1 // pred_fallthru
      _
    // Predicated region
    $region94: #{encoder_forward.1} parent=1 // pred_check
      _
    $region95: #{encoder_forward.1} parent=1 // pred_check_branch
      %165 = sbr.rel (0) target = $region97
    $region96: #{encoder_forward.1} parent=1 // pred_region
      %167 = vsyncadd [#allocation9], 0
      %s169 = sshll.u32 %s47, 4
      %s170 = int_to_ptr.hbm [resolvable:$true] %s169
      %s171 = sshll.u32 [#allocation10], 4
      %s172 = int_to_ptr.vmem [resolvable:$true] %s171
      %174 = dma.hbm_to_vmem [thread:$0]  %s170, 16, %s172, [#allocation9]
    $region97: #{encoder_forward.1} parent=1 // pred_fallthru
      _
    // Predicated region
    $region98: #{encoder_forward.1} parent=1 // pred_check
      _
    $region99: #{encoder_forward.1} parent=1 // pred_check_branch
      %176 = sbr.rel (0) target = $region101
    $region100: #{encoder_forward.1} parent=1 // pred_region
      _
    $region101: #{encoder_forward.1} parent=1 // pred_fallthru
      _
    // Predicated region
    $region102: #{encoder_forward.1} parent=1 // pred_check
      _
    $region103: #{encoder_forward.1} parent=1 // pred_check_branch
      %178 = sbr.rel (0) target = $region105
    $region104: #{encoder_forward.1} parent=1 // pred_region
      %180 = vsyncadd [#allocation12], 0
      %s182 = sshll.u32 %s51, 4
      %s183 = int_to_ptr.hbm [resolvable:$true] %s182
      %s184 = sshll.u32 [#allocation11], 4
      %s185 = int_to_ptr.vmem [resolvable:$true] %s184
      %187 = dma.hbm_to_vmem [thread:$0]  %s183, 16, %s185, [#allocation12]
    $region105: #{encoder_forward.1} parent=1 // pred_fallthru
      _
    // Predicated region
    $region106: #{encoder_forward.1} parent=1 // pred_check
      _
    $region107: #{encoder_forward.1} parent=1 // pred_check_branch
      %189 = sbr.rel (0) target = $region109
    $region108: #{encoder_forward.1} parent=1 // pred_region
      _
    $region109: #{encoder_forward.1} parent=1 // pred_fallthru
      _
    // Predicated region
    $region110: #{encoder_forward.1} parent=1 // pred_check
      _
    $region111: #{encoder_forward.1} parent=1 // pred_check_branch
      %191 = sbr.rel (0) target = $region113
    $region112: #{encoder_forward.1} parent=1 // pred_region
      %193 = vsyncadd [#allocation12], 0
      %s195 = sshll.u32 %s55, 4
      %s196 = int_to_ptr.hbm [resolvable:$true] %s195
      %s197 = sshll.u32 [#allocation13], 4
      %s198 = int_to_ptr.vmem [resolvable:$true] %s197
      %200 = dma.hbm_to_vmem [thread:$0]  %s196, 16, %s198, [#allocation12]
    $region113: #{encoder_forward.1} parent=1 // pred_fallthru
      _
    // Predicated region
    $region114: #{encoder_forward.1} parent=1 // pred_check
      _
    $region115: #{encoder_forward.1} parent=1 // pred_check_branch
      %202 = sbr.rel (0) target = $region117
    $region116: #{encoder_forward.1} parent=1 // pred_region
      _
    $region117: #{encoder_forward.1} parent=1 // pred_fallthru
      _
    // Predicated region
    $region118: #{encoder_forward.1} parent=1 // pred_check
      _
    $region119: #{encoder_forward.1} parent=1 // pred_check_branch
      %204 = sbr.rel (0) target = $region121
    $region120: #{encoder_forward.1} parent=1 // pred_region
      %206 = vsyncadd [#allocation15], 0
      %s208 = sshll.u32 %s59, 4
      %s209 = int_to_ptr.hbm [resolvable:$true] %s208
      %s210 = sshll.u32 [#allocation14], 4
      %s211 = int_to_ptr.vmem [resolvable:$true] %s210
      %213 = dma.hbm_to_vmem [thread:$0]  %s209, 16, %s211, [#allocation15]
    $region121: #{encoder_forward.1} parent=1 // pred_fallthru
      _
    // Predicated region
    $region122: #{encoder_forward.1} parent=1 // pred_check
      _
    $region123: #{encoder_forward.1} parent=1 // pred_check_branch
      %215 = sbr.rel (0) target = $region125
    $region124: #{encoder_forward.1} parent=1 // pred_region
      %217 = vsyncadd [#allocation15], 0
      %s218 = sshll.u32 %s61, 4
      %s219 = int_to_ptr.hbm [resolvable:$true] %s218
      %s220 = sshll.u32 [#allocation16], 4
      %s221 = int_to_ptr.vmem [resolvable:$true] %s220
      %226 = dma.hbm_to_vmem [thread:$0]  %s219, 256, %s221, [#allocation15], 128, 128, 8
    $region125: #{encoder_forward.1} parent=1 // pred_fallthru
      _
    // Predicated region
    $region126: #{encoder_forward.1} parent=1 // pred_check
      _
    $region127: #{encoder_forward.1} parent=1 // pred_check_branch
      %228 = sbr.rel (0) target = $region129
    $region128: #{encoder_forward.1} parent=1 // pred_region
      %230 = dma.done [#allocation3], 256
    $region129: #{encoder_forward.1} parent=1 // pred_fallthru
      _
    // Predicated region
    $region130: #{encoder_forward.1} parent=1 // pred_check
      _
    $region131: #{encoder_forward.1} parent=1 // pred_check_branch
      %232 = sbr.rel (0) target = $region133
    $region132: #{encoder_forward.1} parent=1 // pred_region
      %234 = dma.done [#allocation6], 128
    $region133: #{encoder_forward.1} parent=1 // pred_fallthru
      _
    // Predicated region
    $region134: #{encoder_forward.1} parent=1 // pred_check
      _
    $region135: #{encoder_forward.1} parent=1 // pred_check_branch
      %236 = sbr.rel (0) target = $region137
    $region136: #{encoder_forward.1} parent=1 // pred_region
      %238 = dma.done [#allocation6], 16
    $region137: #{encoder_forward.1} parent=1 // pred_fallthru
      _
    // Predicated region
    $region138: #{encoder_forward.1} parent=1 // pred_check
      _
    $region139: #{encoder_forward.1} parent=1 // pred_check_branch
      %240 = sbr.rel (0) target = $region141
    $region140: #{encoder_forward.1} parent=1 // pred_region
      %242 = dma.done [#allocation9], 16
    $region141: #{encoder_forward.1} parent=1 // pred_fallthru
      _
    // Predicated region
    $region142: #{encoder_forward.1} parent=1 // pred_check
      _
    $region143: #{encoder_forward.1} parent=1 // pred_check_branch
      %244 = sbr.rel (0) target = $region145
    $region144: #{encoder_forward.1} parent=1 // pred_region
      %246 = dma.done [#allocation9], 16
    $region145: #{encoder_forward.1} parent=1 // pred_fallthru
      _
    // Predicated region
    $region146: #{encoder_forward.1} parent=1 // pred_check
      _
    $region147: #{encoder_forward.1} parent=1 // pred_check_branch
      %248 = sbr.rel (0) target = $region149
    $region148: #{encoder_forward.1} parent=1 // pred_region
      %250 = dma.done [#allocation12], 16
    $region149: #{encoder_forward.1} parent=1 // pred_fallthru
      _
    // Predicated region
    $region150: #{encoder_forward.1} parent=1 // pred_check
      _
    $region151: #{encoder_forward.1} parent=1 // pred_check_branch
      %252 = sbr.rel (0) target = $region153
    $region152: #{encoder_forward.1} parent=1 // pred_region
      %254 = dma.done [#allocation12], 16
    $region153: #{encoder_forward.1} parent=1 // pred_fallthru
      _
    // Predicated region
    $region154: #{encoder_forward.1} parent=1 // pred_check
      _
    $region155: #{encoder_forward.1} parent=1 // pred_check_branch
      %256 = sbr.rel (0) target = $region157
    $region156: #{encoder_forward.1} parent=1 // pred_region
      %258 = dma.done [#allocation15], 16
    $region157: #{encoder_forward.1} parent=1 // pred_fallthru
      _
    // Predicated region
    $region158: #{encoder_forward.1} parent=1 // pred_check
      _
    $region159: #{encoder_forward.1} parent=1 // pred_check_branch
      %260 = sbr.rel (0) target = $region161
    $region160: #{encoder_forward.1} parent=1 // pred_region
      %262 = dma.done [#allocation15], 256
    $region161: #{encoder_forward.1} parent=1 // pred_fallthru
      _
    %v264 = vld [vmem:[%s1] sm:$0xff]
    %v265 = vld [vmem:[%s1 + $0x8] sm:$0xff]
    %v266 = vld [vmem:[#allocation2] sm:$0xff]
    %v267 = vld [vmem:[#allocation2 + $0x8] sm:$0xff]
    %v268 = vpack.c.bf16 %v265, %v264
    %v269 = vpack.c.bf16 %v267, %v266
    %v270 = vld [vmem:[%s15] sm:$0x1]
    %v272 = vperm.slane %v270, 0
    %vm274 = vcmask 130048
    %v276 = vsel %vm274, %v268, 0
    %278 = vmatpush.bf16.msra.mxu0 0
    %279 = vmatpush.bf16.msra.mxu0 0
    %280 = vmatpush.bf16.msra.mxu0 0
    %281 = vmatpush.bf16.msra.mxu0 0
    %282 = vmatpush.bf16.msra.mxu0 0
    %283 = vmatpush.bf16.msra.mxu0 0
    %284 = vmatpush.bf16.msra.mxu0 0
    %285 = vmatpush.bf16.msra.mxu0 %v269
    %286 = vmatmul.bf16.gmra.mxu0 %v276
    %v287 = vpop.f32.mrf.mxu0
    %v288 = vadd.f32 %v272, %v287
    %v289 = vpop.f32.mrf.mxu0
    %v290 = vadd.f32 %v272, %v289
    %291 = vdwg.mxu0
    %v292 = vld [vmem:[%s17] sm:$0x1]
    %v293 = vld [vmem:[%s19] sm:$0x1]
    %vm294 = vcmask 261120
    %v295 = vsel %vm294, %v288, 0.0
    %296 = vadd.xlane.f32.xlu0 %v295
    %v297 = vpop.xlane.xlu0 %296
    %v298 = vsel %vm294, %v290, 0.0
    %299 = vadd.xlane.f32.xlu0 %v298
    %v300 = vpop.xlane.xlu0 %299
    %v301 = vrcp.pop 32.0
    %v302 = vmul.f32 32.0, %v301
    %v303 = vsub.f32 1.0, %v302
    %v304 = vmul.f32 %v301, %v303
    %v305 = vadd.f32 %v301, %v304
    %vm306 = vweird.f32 %v301
    %v307 = vsel %vm306, %v301, %v305
    %v308 = vmul.f32 %v297, %v307
    %v309 = vmul.f32 %v300, %v307
    %v310 = vsub.f32 %v288, %v308
    %v311 = vsub.f32 %v290, %v309
    %v312 = vmul.f32 %v310, %v310
    %v313 = vmul.f32 %v311, %v311
    %v314 = vsel %vm294, %v312, 0.0
    %315 = vadd.xlane.f32.xlu0 %v314
    %v316 = vpop.xlane.xlu0 %315
    %v317 = vsel %vm294, %v313, 0.0
    %318 = vadd.xlane.f32.xlu0 %v317
    %v319 = vpop.xlane.xlu0 %318
    %v320 = vmul.f32 %v316, %v307
    %v321 = vmul.f32 %v319, %v307
    %v322 = vadd.f32 %v320, 1e-05
    %v323 = vadd.f32 %v321, 1e-05
    %v324 = vrsqrt.pop %v322
    %v325 = vmul.f32 %v324, %v322
    %v326 = vmul.f32 %v325, %v324
    %v327 = vmul.f32 0.5, %v326
    %v328 = vsub.f32 1.5, %v327
    %v329 = vmul.f32 %v324, %v328
    %vm330 = vweird.f32 %v322
    %vm331 = vweird.f32 %v324
    %vm332 = vmor %vm330, %vm331
    %v333 = vsel %vm332, %v324, %v329
    %v334 = vrsqrt.pop %v323
    %v335 = vmul.f32 %v334, %v323
    %v336 = vmul.f32 %v335, %v334
    %v337 = vmul.f32 0.5, %v336
    %v338 = vsub.f32 1.5, %v337
    %v339 = vmul.f32 %v334, %v338
    %vm340 = vweird.f32 %v323
    %vm341 = vweird.f32 %v334
    %vm342 = vmor %vm340, %vm341
    %v343 = vsel %vm342, %v334, %v339
    %v344 = vmul.f32 %v310, %v333
    %v345 = vmul.f32 %v311, %v343
    %v347 = vperm.slane %v292, 0
    %v349 = vmul.f32 %v344, %v347
    %v350 = vmul.f32 %v345, %v347
    %v352 = vperm.slane %v293, 0
    %v354 = vadd.f32 %v349, %v352
    %v355 = vadd.f32 %v350, %v352
    %v356 = vmul.f32 %v354, 0.5
    %v357 = vmul.f32 %v355, 0.5
    %v358 = vrcp.pop 1.4142135
    %v359 = vmul.f32 1.4142135, %v358
    %v360 = vsub.f32 1.0, %v359
    %v361 = vmul.f32 %v358, %v360
    %v362 = vadd.f32 %v358, %v361
    %vm363 = vweird.f32 %v358
    %v364 = vsel %vm363, %v358, %v362
    %v365 = vmul.f32 %v354, %v364
    %v366 = vmul.f32 %v355, %v364
    %v367 = vmul.f32 %v365, %v365
    %v368 = vmin.f32 16.0, %v367
    %v369 = vmul.f32 %v368, 2.1237322e-06
    %v370 = vadd.f32 %v369, 0.00028619796
    %v371 = vmul.f32 %v368, %v370
    %v372 = vadd.f32 %v371, 0.0036580483
    %v373 = vmul.f32 %v368, %v372
    %v374 = vadd.f32 %v373, 0.05243302
    %v375 = vmul.f32 %v368, %v374
    %v376 = vadd.f32 %v375, 0.18741608
    %v377 = vmul.f32 %v368, %v376
    %v378 = vadd.f32 %v377, 1.1283791
    %v379 = vmul.f32 %v365, %v378
    %v380 = vmul.f32 %v368, 3.8918573e-05
    %v381 = vadd.f32 %v380, 0.001143296
    %v382 = vmul.f32 %v368, %v381
    %v383 = vadd.f32 %v382, 0.014752088
    %v384 = vmul.f32 %v368, %v383
    %v385 = vadd.f32 %v384, 0.112945676
    %v386 = vmul.f32 %v368, %v385
    %v387 = vadd.f32 %v386, 0.4994258
    %v388 = vmul.f32 %v368, %v387
    %v389 = vadd.f32 %v388, 1.0
    %v390 = vrcp.pop %v389
    %v391 = vmul.f32 %v389, %v390
    %v392 = vsub.f32 1.0, %v391
    %v393 = vmul.f32 %v390, %v392
    %v394 = vadd.f32 %v390, %v393
    %vm395 = vweird.f32 %v389
    %vm396 = vweird.f32 %v390
    %vm397 = vmor %vm395, %vm396
    %v398 = vsel %vm397, %v390, %v394
    %v399 = vand.u32 2147483647, %v389
    %vm400 = vcmp.eq.f32.partialorder %v399, 8.507059e+37
    %v401 = vand.u32 %v389, 2147483648
    %v402 = vor.u32 1.1754944e-38, %v401
    %v403 = vsel %vm400, %v402, %v398
    %v404 = vmul.f32 %v379, %v403
    %v405 = vmin.f32 %v404, 1.0
    %v406 = vmax.f32 %v405, -1.0
    %v407 = vmul.f32 %v366, %v366
    %v408 = vmin.f32 16.0, %v407
    %v409 = vmul.f32 %v408, 2.1237322e-06
    %v410 = vadd.f32 %v409, 0.00028619796
    %v411 = vmul.f32 %v408, %v410
    %v412 = vadd.f32 %v411, 0.0036580483
    %v413 = vmul.f32 %v408, %v412
    %v414 = vadd.f32 %v413, 0.05243302
    %v415 = vmul.f32 %v408, %v414
    %v416 = vadd.f32 %v415, 0.18741608
    %v417 = vmul.f32 %v408, %v416
    %v418 = vadd.f32 %v417, 1.1283791
    %v419 = vmul.f32 %v366, %v418
    %v420 = vmul.f32 %v408, 3.8918573e-05
    %v421 = vadd.f32 %v420, 0.001143296
    %v422 = vmul.f32 %v408, %v421
    %v423 = vadd.f32 %v422, 0.014752088
    %v424 = vmul.f32 %v408, %v423
    %v425 = vadd.f32 %v424, 0.112945676
    %v426 = vmul.f32 %v408, %v425
    %v427 = vadd.f32 %v426, 0.4994258
    %v428 = vmul.f32 %v408, %v427
    %v429 = vadd.f32 %v428, 1.0
    %v430 = vrcp.pop %v429
    %v431 = vmul.f32 %v429, %v430
    %v432 = vsub.f32 1.0, %v431
    %v433 = vmul.f32 %v430, %v432
    %v434 = vadd.f32 %v430, %v433
    %vm435 = vweird.f32 %v429
    %vm436 = vweird.f32 %v430
    %vm437 = vmor %vm435, %vm436
    %v438 = vsel %vm437, %v430, %v434
    %v439 = vand.u32 2147483647, %v429
    %vm440 = vcmp.eq.f32.partialorder %v439, 8.507059e+37
    %v441 = vand.u32 %v429, 2147483648
    %v442 = vor.u32 1.1754944e-38, %v441
    %v443 = vsel %vm440, %v442, %v438
    %v444 = vmul.f32 %v419, %v443
    %v445 = vmin.f32 %v444, 1.0
    %v446 = vmax.f32 %v445, -1.0
    %v447 = vadd.f32 %v406, 1.0
    %v448 = vadd.f32 %v446, 1.0
    %v449 = vmul.f32 %v356, %v447
    %v450 = vmul.f32 %v357, %v448
    %v451 = vld [vmem:[%s21] sm:$0xff]
    %v452 = vld [vmem:[%s21 + $0x8] sm:$0xff]
    %v453 = vld [vmem:[%s21 + $0x10] sm:$0xff]
    %v454 = vld [vmem:[%s21 + $0x18] sm:$0xff]
    %v455 = vpack.c.bf16 %v450, %v449
    %v456 = vpack.c.bf16 %v452, %v451
    %v457 = vpack.c.bf16 %v454, %v453
    %v458 = vld [vmem:[%s23] sm:$0x1]
    %v460 = vperm.slane %v458, 0
    %v463 = vsel %vm294, %v455, 0
    %465 = vmatpush.bf16.msra.mxu0 0
    %466 = vmatpush.bf16.msra.mxu0 0
    %467 = vmatpush.bf16.msra.mxu0 0
    %468 = vmatpush.bf16.msra.mxu0 0
    %469 = vmatpush.bf16.msra.mxu0 0
    %470 = vmatpush.bf16.msra.mxu0 0
    %471 = vmatpush.bf16.msra.mxu0 %v457
    %472 = vmatpush.bf16.msra.mxu0 %v456
    %473 = vmatmul.bf16.gmra.mxu0 %v463
    %v474 = vpop.f32.mrf.mxu0
    %v475 = vadd.f32 %v460, %v474
    %v476 = vpop.f32.mrf.mxu0
    %v477 = vadd.f32 %v460, %v476
    %478 = vdwg.mxu0
    %v479 = vld [vmem:[%s25] sm:$0x1]
    %v480 = vld [vmem:[%s27] sm:$0x1]
    %v481 = vsel %vm294, %v475, 0.0
    %482 = vadd.xlane.f32.xlu0 %v481
    %v483 = vpop.xlane.xlu0 %482
    %v484 = vsel %vm294, %v477, 0.0
    %485 = vadd.xlane.f32.xlu0 %v484
    %v486 = vpop.xlane.xlu0 %485
    %v487 = vmul.f32 %v483, %v307
    %v488 = vmul.f32 %v486, %v307
    %v489 = vsub.f32 %v475, %v487
    %v490 = vsub.f32 %v477, %v488
    %v491 = vmul.f32 %v489, %v489
    %v492 = vmul.f32 %v490, %v490
    %v493 = vsel %vm294, %v491, 0.0
    %494 = vadd.xlane.f32.xlu0 %v493
    %v495 = vpop.xlane.xlu0 %494
    %v496 = vsel %vm294, %v492, 0.0
    %497 = vadd.xlane.f32.xlu0 %v496
    %v498 = vpop.xlane.xlu0 %497
    %v499 = vmul.f32 %v495, %v307
    %v500 = vmul.f32 %v498, %v307
    %v501 = vadd.f32 %v499, 1e-05
    %v502 = vadd.f32 %v500, 1e-05
    %v503 = vrsqrt.pop %v501
    %v504 = vmul.f32 %v503, %v501
    %v505 = vmul.f32 %v504, %v503
    %v506 = vmul.f32 0.5, %v505
    %v507 = vsub.f32 1.5, %v506
    %v508 = vmul.f32 %v503, %v507
    %vm509 = vweird.f32 %v501
    %vm510 = vweird.f32 %v503
    %vm511 = vmor %vm509, %vm510
    %v512 = vsel %vm511, %v503, %v508
    %v513 = vrsqrt.pop %v502
    %v514 = vmul.f32 %v513, %v502
    %v515 = vmul.f32 %v514, %v513
    %v516 = vmul.f32 0.5, %v515
    %v517 = vsub.f32 1.5, %v516
    %v518 = vmul.f32 %v513, %v517
    %vm519 = vweird.f32 %v502
    %vm520 = vweird.f32 %v513
    %vm521 = vmor %vm519, %vm520
    %v522 = vsel %vm521, %v513, %v518
    %v523 = vmul.f32 %v489, %v512
    %v524 = vmul.f32 %v490, %v522
    %v526 = vperm.slane %v479, 0
    %v528 = vmul.f32 %v523, %v526
    %v529 = vmul.f32 %v524, %v526
    %v531 = vperm.slane %v480, 0
    %v533 = vadd.f32 %v528, %v531
    %v534 = vadd.f32 %v529, %v531
    %v535 = vmul.f32 %v533, 0.5
    %v536 = vmul.f32 %v534, 0.5
    %v537 = vmul.f32 %v533, %v364
    %v538 = vmul.f32 %v534, %v364
    %v539 = vmul.f32 %v537, %v537
    %v540 = vmin.f32 16.0, %v539
    %v541 = vmul.f32 %v540, 2.1237322e-06
    %v542 = vadd.f32 %v541, 0.00028619796
    %v543 = vmul.f32 %v540, %v542
    %v544 = vadd.f32 %v543, 0.0036580483
    %v545 = vmul.f32 %v540, %v544
    %v546 = vadd.f32 %v545, 0.05243302
    %v547 = vmul.f32 %v540, %v546
    %v548 = vadd.f32 %v547, 0.18741608
    %v549 = vmul.f32 %v540, %v548
    %v550 = vadd.f32 %v549, 1.1283791
    %v551 = vmul.f32 %v537, %v550
    %v552 = vmul.f32 %v540, 3.8918573e-05
    %v553 = vadd.f32 %v552, 0.001143296
    %v554 = vmul.f32 %v540, %v553
    %v555 = vadd.f32 %v554, 0.014752088
    %v556 = vmul.f32 %v540, %v555
    %v557 = vadd.f32 %v556, 0.112945676
    %v558 = vmul.f32 %v540, %v557
    %v559 = vadd.f32 %v558, 0.4994258
    %v560 = vmul.f32 %v540, %v559
    %v561 = vadd.f32 %v560, 1.0
    %v562 = vrcp.pop %v561
    %v563 = vmul.f32 %v561, %v562
    %v564 = vsub.f32 1.0, %v563
    %v565 = vmul.f32 %v562, %v564
    %v566 = vadd.f32 %v562, %v565
    %vm567 = vweird.f32 %v561
    %vm568 = vweird.f32 %v562
    %vm569 = vmor %vm567, %vm568
    %v570 = vsel %vm569, %v562, %v566
    %v571 = vand.u32 2147483647, %v561
    %vm572 = vcmp.eq.f32.partialorder %v571, 8.507059e+37
    %v573 = vand.u32 %v561, 2147483648
    %v574 = vor.u32 1.1754944e-38, %v573
    %v575 = vsel %vm572, %v574, %v570
    %v576 = vmul.f32 %v551, %v575
    %v577 = vmin.f32 %v576, 1.0
    %v578 = vmax.f32 %v577, -1.0
    %v579 = vmul.f32 %v538, %v538
    %v580 = vmin.f32 16.0, %v579
    %v581 = vmul.f32 %v580, 2.1237322e-06
    %v582 = vadd.f32 %v581, 0.00028619796
    %v583 = vmul.f32 %v580, %v582
    %v584 = vadd.f32 %v583, 0.0036580483
    %v585 = vmul.f32 %v580, %v584
    %v586 = vadd.f32 %v585, 0.05243302
    %v587 = vmul.f32 %v580, %v586
    %v588 = vadd.f32 %v587, 0.18741608
    %v589 = vmul.f32 %v580, %v588
    %v590 = vadd.f32 %v589, 1.1283791
    %v591 = vmul.f32 %v538, %v590
    %v592 = vmul.f32 %v580, 3.8918573e-05
    %v593 = vadd.f32 %v592, 0.001143296
    %v594 = vmul.f32 %v580, %v593
    %v595 = vadd.f32 %v594, 0.014752088
    %v596 = vmul.f32 %v580, %v595
    %v597 = vadd.f32 %v596, 0.112945676
    %v598 = vmul.f32 %v580, %v597
    %v599 = vadd.f32 %v598, 0.4994258
    %v600 = vmul.f32 %v580, %v599
    %v601 = vadd.f32 %v600, 1.0
    %v602 = vrcp.pop %v601
    %v603 = vmul.f32 %v601, %v602
    %v604 = vsub.f32 1.0, %v603
    %v605 = vmul.f32 %v602, %v604
    %v606 = vadd.f32 %v602, %v605
    %vm607 = vweird.f32 %v601
    %vm608 = vweird.f32 %v602
    %vm609 = vmor %vm607, %vm608
    %v610 = vsel %vm609, %v602, %v606
    %v611 = vand.u32 2147483647, %v601
    %vm612 = vcmp.eq.f32.partialorder %v611, 8.507059e+37
    %v613 = vand.u32 %v601, 2147483648
    %v614 = vor.u32 1.1754944e-38, %v613
    %v615 = vsel %vm612, %v614, %v610
    %v616 = vmul.f32 %v591, %v615
    %v617 = vmin.f32 %v616, 1.0
    %v618 = vmax.f32 %v617, -1.0
    %v619 = vadd.f32 %v578, 1.0
    %v620 = vadd.f32 %v618, 1.0
    %v621 = vmul.f32 %v535, %v619
    %v622 = vmul.f32 %v536, %v620
    %v623 = vlaneseq
    %v624 = vand.u32 %v623, 127
    %v625 = vld [vmem:[%s7] sm:$0xff]
    %v626 = vld [vmem:[%s7 + $0x8] sm:$0xff]
    %v627 = vld [vmem:[%s7 + $0x10] sm:$0xff]
    %v628 = vld [vmem:[%s7 + $0x18] sm:$0xff]
    %v629 = vld [vmem:[%s7 + $0x20] sm:$0xff]
    %v630 = vld [vmem:[%s7 + $0x28] sm:$0xff]
    %631 = vset.pattern.permute.xlu0 0
    %632 = vperm.xlu0 %631, %v625
    %v633 = vpop.permute.xlu0 %632
    %634 = vset.pattern.permute.xlu0 0
    %635 = vperm.xlu0 %634, %v626
    %v636 = vpop.permute.xlu0 %635
    %637 = vset.pattern.permute.xlu0 0
    %638 = vperm.xlu0 %637, %v627
    %v639 = vpop.permute.xlu0 %638
    %640 = vset.pattern.permute.xlu0 0
    %641 = vperm.xlu0 %640, %v628
    %v642 = vpop.permute.xlu0 %641
    %643 = vset.pattern.permute.xlu0 0
    %644 = vperm.xlu0 %643, %v629
    %v645 = vpop.permute.xlu0 %644
    %646 = vset.pattern.permute.xlu0 0
    %647 = vperm.xlu0 %646, %v630
    %v648 = vpop.permute.xlu0 %647
    %vm649 = vcmp.eq.s32.totalorder %v624, %v633
    %vm650 = vcmp.eq.s32.totalorder %v624, %v636
    %vm651 = vcmp.eq.s32.totalorder %v624, %v639
    %vm652 = vcmp.eq.s32.totalorder %v624, %v642
    %vm653 = vcmp.eq.s32.totalorder %v624, %v645
    %vm654 = vcmp.eq.s32.totalorder %v624, %v648
    %v655 = vsel %vm649, 1, 0
    %v656 = vsel %vm650, 1, 0
    %v657 = vsel %vm651, 1, 0
    %v658 = vsel %vm652, 1, 0
    %v659 = vsel %vm653, 1, 0
    %v660 = vsel %vm654, 1, 0
    %v661 = vcvt.s32.f32 %v655
    %v662 = vcvt.s32.f32 %v656
    %v663 = vcvt.s32.f32 %v657
    %v664 = vcvt.s32.f32 %v658
    %v665 = vcvt.s32.f32 %v659
    %v666 = vcvt.s32.f32 %v660
    %v667 = vld [vmem:[%s9] sm:$0xff]
    %v668 = vld [vmem:[%s9 + $0x8] sm:$0xff]
    %v669 = vld [vmem:[%s9 + $0x10] sm:$0xff]
    %v670 = vld [vmem:[%s9 + $0x18] sm:$0xff]
    %v671 = vld [vmem:[%s9 + $0x20] sm:$0xff]
    %v672 = vld [vmem:[%s9 + $0x28] sm:$0xff]
    %673 = vset.pattern.permute.xlu0 0
    %674 = vperm.xlu0 %673, %v667
    %v675 = vpop.permute.xlu0 %674
    %676 = vset.pattern.permute.xlu0 0
    %677 = vperm.xlu0 %676, %v668
    %v678 = vpop.permute.xlu0 %677
    %679 = vset.pattern.permute.xlu0 0
    %680 = vperm.xlu0 %679, %v669
    %v681 = vpop.permute.xlu0 %680
    %682 = vset.pattern.permute.xlu0 0
    %683 = vperm.xlu0 %682, %v670
    %v684 = vpop.permute.xlu0 %683
    %685 = vset.pattern.permute.xlu0 0
    %686 = vperm.xlu0 %685, %v671
    %v687 = vpop.permute.xlu0 %686
    %688 = vset.pattern.permute.xlu0 0
    %689 = vperm.xlu0 %688, %v672
    %v690 = vpop.permute.xlu0 %689
    %vm691 = vcmp.eq.s32.totalorder %v624, %v675
    %vm692 = vcmp.eq.s32.totalorder %v624, %v678
    %vm693 = vcmp.eq.s32.totalorder %v624, %v681
    %vm694 = vcmp.eq.s32.totalorder %v624, %v684
    %vm695 = vcmp.eq.s32.totalorder %v624, %v687
    %vm696 = vcmp.eq.s32.totalorder %v624, %v690
    %v697 = vsel %vm691, 1, 0
    %v698 = vsel %vm692, 1, 0
    %v699 = vsel %vm693, 1, 0
    %v700 = vsel %vm694, 1, 0
    %v701 = vsel %vm695, 1, 0
    %v702 = vsel %vm696, 1, 0
    %v703 = vcvt.s32.f32 %v697
    %v704 = vcvt.s32.f32 %v698
    %v705 = vcvt.s32.f32 %v699
    %v706 = vcvt.s32.f32 %v700
    %v707 = vcvt.s32.f32 %v701
    %v708 = vcvt.s32.f32 %v702
    %v709 = vpack.c.bf16 %v662, %v661
    %v710 = vpack.c.bf16 %v664, %v663
    %v711 = vpack.c.bf16 %v666, %v665
    %v712 = vpack.c.bf16 %v622, %v621
    %v714 = vsel %vm274, %v709, 0
    %v717 = vsel %vm274, %v710, 0
    %v720 = vsel %vm274, %v711, 0
    %722 = vmatpush.bf16.msra.mxu0 0
    %723 = vmatpush.bf16.msra.mxu0 0
    %724 = vmatpush.bf16.msra.mxu0 0
    %725 = vmatpush.bf16.msra.mxu0 0
    %726 = vmatpush.bf16.msra.mxu0 0
    %727 = vmatpush.bf16.msra.mxu0 0
    %728 = vmatpush.bf16.msra.mxu0 0
    %729 = vmatpush.bf16.msra.mxu0 %v712
    %730 = vmatmul.bf16.gmra.mxu0 %v714
    %v731 = vpop.f32.mrf.mxu0
    %v732 = vadd.f32 0.0, %v731
    %v733 = vpop.f32.mrf.mxu0
    %v734 = vadd.f32 0.0, %v733
    %735 = vmatmul.bf16.gmra.mxu0 %v717
    %v736 = vpop.f32.mrf.mxu0
    %v737 = vadd.f32 0.0, %v736
    %v738 = vpop.f32.mrf.mxu0
    %v739 = vadd.f32 0.0, %v738
    %740 = vmatmul.bf16.gmra.mxu0 %v720
    %v741 = vpop.f32.mrf.mxu0
    %v742 = vadd.f32 0.0, %v741
    %v743 = vpop.f32.mrf.mxu0
    %v744 = vadd.f32 0.0, %v743
    %745 = vdwg.mxu0
    %v746 = vpack.c.bf16 %v704, %v703
    %v747 = vpack.c.bf16 %v706, %v705
    %v748 = vpack.c.bf16 %v708, %v707
    %v750 = vsel %vm274, %v746, 0
    %v753 = vsel %vm274, %v747, 0
    %v756 = vsel %vm274, %v748, 0
    %758 = vmatpush.bf16.msra.mxu0 0
    %759 = vmatpush.bf16.msra.mxu0 0
    %760 = vmatpush.bf16.msra.mxu0 0
    %761 = vmatpush.bf16.msra.mxu0 0
    %762 = vmatpush.bf16.msra.mxu0 0
    %763 = vmatpush.bf16.msra.mxu0 0
    %764 = vmatpush.bf16.msra.mxu0 0
    %765 = vmatpush.bf16.msra.mxu0 %v712
    %766 = vmatmul.bf16.gmra.mxu0 %v750
    %v767 = vpop.f32.mrf.mxu0
    %v768 = vadd.f32 0.0, %v767
    %v769 = vpop.f32.mrf.mxu0
    %v770 = vadd.f32 0.0, %v769
    %771 = vmatmul.bf16.gmra.mxu0 %v753
    %v772 = vpop.f32.mrf.mxu0
    %v773 = vadd.f32 0.0, %v772
    %v774 = vpop.f32.mrf.mxu0
    %v775 = vadd.f32 0.0, %v774
    %776 = vmatmul.bf16.gmra.mxu0 %v756
    %v777 = vpop.f32.mrf.mxu0
    %v778 = vadd.f32 0.0, %v777
    %v779 = vpop.f32.mrf.mxu0
    %v780 = vadd.f32 0.0, %v779
    %781 = vdwg.mxu0
    %v782 = vsub.f32 %v661, %v703
    %v783 = vsub.f32 %v662, %v704
    %v784 = vsub.f32 %v663, %v705
    %v785 = vsub.f32 %v664, %v706
    %v786 = vsub.f32 %v665, %v707
    %v787 = vsub.f32 %v666, %v708
    %v788 = vld [vmem:[%s5] sm:$0xff]
    %v789 = vld [vmem:[%s5 + $0x8] sm:$0xff]
    %v791 = vsel %vm274, %v782, 0
    %v794 = vsel %vm274, %v783, 0
    %v797 = vsel %vm274, %v784, 0
    %v800 = vsel %vm274, %v785, 0
    %v803 = vsel %vm274, %v786, 0
    %v806 = vsel %vm274, %v787, 0
    %808 = vmatpush.msra.mxu0 0.0
    %809 = vmatpush.msra.mxu0 0.0
    %810 = vmatpush.msra.mxu0 0.0
    %811 = vmatpush.msra.mxu0 0.0
    %812 = vmatpush.msra.mxu0 0.0
    %813 = vmatpush.msra.mxu0 0.0
    %814 = vmatpush.msra.mxu0 0.0
    %815 = vmatpush.msra.mxu0 0.0
    %816 = vmatpush.msra.mxu0 0.0
    %817 = vmatpush.msra.mxu0 0.0
    %818 = vmatpush.msra.mxu0 0.0
    %819 = vmatpush.msra.mxu0 0.0
    %820 = vmatpush.msra.mxu0 0.0
    %821 = vmatpush.msra.mxu0 0.0
    %822 = vmatpush.msra.mxu0 %v789
    %823 = vmatpush.msra.mxu0 %v788
    %824 = vmatmul.f32.gmra.mxu0 %v791
    %v825 = vpop.f32.mrf.mxu0
    %v826 = vadd.f32 0.0, %v825
    %827 = vmatmul.f32.gmra.mxu0 %v794
    %v828 = vpop.f32.mrf.mxu0
    %v829 = vadd.f32 0.0, %v828
    %830 = vmatmul.f32.gmra.mxu0 %v797
    %v831 = vpop.f32.mrf.mxu0
    %v832 = vadd.f32 0.0, %v831
    %833 = vmatmul.f32.gmra.mxu0 %v800
    %v834 = vpop.f32.mrf.mxu0
    %v835 = vadd.f32 0.0, %v834
    %836 = vmatmul.f32.gmra.mxu0 %v803
    %v837 = vpop.f32.mrf.mxu0
    %v838 = vadd.f32 0.0, %v837
    %839 = vmatmul.f32.gmra.mxu0 %v806
    %v840 = vpop.f32.mrf.mxu0
    %v841 = vadd.f32 0.0, %v840
    %842 = vdwg.mxu0
    %v843 = vmul.f32 %v826, %v826
    %v844 = vmul.f32 %v829, %v829
    %v845 = vmul.f32 %v832, %v832
    %v846 = vmul.f32 %v835, %v835
    %v847 = vmul.f32 %v838, %v838
    %v848 = vmul.f32 %v841, %v841
    %vm849 = vcmask 23552
    %v850 = vsel %vm849, %v843, 0.0
    %851 = vadd.xlane.f32.xlu0 %v850
    %v852 = vpop.xlane.xlu0 %851
    %v853 = vsel %vm849, %v844, 0.0
    %854 = vadd.xlane.f32.xlu0 %v853
    %v855 = vpop.xlane.xlu0 %854
    %v856 = vsel %vm849, %v845, 0.0
    %857 = vadd.xlane.f32.xlu0 %v856
    %v858 = vpop.xlane.xlu0 %857
    %v859 = vsel %vm849, %v846, 0.0
    %860 = vadd.xlane.f32.xlu0 %v859
    %v861 = vpop.xlane.xlu0 %860
    %v862 = vsel %vm849, %v847, 0.0
    %863 = vadd.xlane.f32.xlu0 %v862
    %v864 = vpop.xlane.xlu0 %863
    %v865 = vsel %vm849, %v848, 0.0
    %866 = vadd.xlane.f32.xlu0 %v865
    %v867 = vpop.xlane.xlu0 %866
    %v868 = vld [vmem:[%s29] sm:$0xff]
    %v869 = vld [vmem:[%s29 + $0x8] sm:$0xff]
    %v870 = vld [vmem:[%s29 + $0x10] sm:$0xff]
    %v871 = vld [vmem:[%s29 + $0x18] sm:$0xff]
    %v872 = vpack.c.bf16 %v734, %v732
    %v873 = vpack.c.bf16 %v739, %v737
    %v874 = vpack.c.bf16 %v744, %v742
    %v875 = vpack.c.bf16 %v869, %v868
    %v876 = vpack.c.bf16 %v871, %v870
    %v877 = vld [vmem:[%s31] sm:$0xff]
    %v878 = vld [vmem:[%s31 + $0x8] sm:$0xff]
    %v879 = vld [vmem:[%s31 + $0x10] sm:$0xff]
    %v880 = vld [vmem:[%s31 + $0x18] sm:$0xff]
    %v881 = vpack.c.bf16 %v770, %v768
    %v882 = vpack.c.bf16 %v775, %v773
    %v883 = vpack.c.bf16 %v780, %v778
    %v884 = vpack.c.bf16 %v878, %v877
    %v885 = vpack.c.bf16 %v880, %v879
    %v887 = vsel %vm294, %v881, 0
    %v890 = vsel %vm294, %v882, 0
    %v893 = vsel %vm294, %v883, 0
    %895 = vmatpush.bf16.msra.mxu0 0
    %896 = vmatpush.bf16.msra.mxu0 0
    %897 = vmatpush.bf16.msra.mxu0 0
    %898 = vmatpush.bf16.msra.mxu0 0
    %899 = vmatpush.bf16.msra.mxu0 0
    %900 = vmatpush.bf16.msra.mxu0 0
    %901 = vmatpush.bf16.msra.mxu0 %v885
    %902 = vmatpush.bf16.msra.mxu0 %v884
    %903 = vmatmul.bf16.gmra.mxu0 %v887
    %v904 = vpop.f32.mrf.mxu0
    %v905 = vadd.f32 0.0, %v904
    %v906 = vpop.f32.mrf.mxu0
    %v907 = vadd.f32 0.0, %v906
    %908 = vmatmul.bf16.gmra.mxu0 %v890
    %v909 = vpop.f32.mrf.mxu0
    %v910 = vadd.f32 0.0, %v909
    %v911 = vpop.f32.mrf.mxu0
    %v912 = vadd.f32 0.0, %v911
    %913 = vmatmul.bf16.gmra.mxu0 %v893
    %v914 = vpop.f32.mrf.mxu0
    %v915 = vadd.f32 0.0, %v914
    %v916 = vpop.f32.mrf.mxu0
    %v917 = vadd.f32 0.0, %v916
    %918 = vdwg.mxu0
    %v920 = vsel %vm294, %v872, 0
    %v923 = vsel %vm294, %v873, 0
    %v926 = vsel %vm294, %v874, 0
    %928 = vmatpush.bf16.msra.mxu0 0
    %929 = vmatpush.bf16.msra.mxu0 0
    %930 = vmatpush.bf16.msra.mxu0 0
    %931 = vmatpush.bf16.msra.mxu0 0
    %932 = vmatpush.bf16.msra.mxu0 0
    %933 = vmatpush.bf16.msra.mxu0 0
    %934 = vmatpush.bf16.msra.mxu0 %v876
    %935 = vmatpush.bf16.msra.mxu0 %v875
    %936 = vmatmul.bf16.gmra.mxu0 %v920
    %v937 = vpop.f32.mrf.mxu0
    %v938 = vadd.f32 %v905, %v937
    %v939 = vpop.f32.mrf.mxu0
    %v940 = vadd.f32 %v907, %v939
    %941 = vmatmul.bf16.gmra.mxu0 %v923
    %v942 = vpop.f32.mrf.mxu0
    %v943 = vadd.f32 %v910, %v942
    %v944 = vpop.f32.mrf.mxu0
    %v945 = vadd.f32 %v912, %v944
    %946 = vmatmul.bf16.gmra.mxu0 %v926
    %v947 = vpop.f32.mrf.mxu0
    %v948 = vadd.f32 %v915, %v947
    %v949 = vpop.f32.mrf.mxu0
    %v950 = vadd.f32 %v917, %v949
    %951 = vdwg.mxu0
    %v952 = vld [vmem:[%s33] sm:$0x1]
    %v954 = vperm.slane %v952, 0
    %v956 = vmul.f32 %v852, %v954
    %v957 = vmul.f32 %v855, %v954
    %v958 = vmul.f32 %v858, %v954
    %v959 = vmul.f32 %v861, %v954
    %v960 = vmul.f32 %v864, %v954
    %v961 = vmul.f32 %v867, %v954
    %v962 = vadd.f32 %v938, %v956
    %v963 = vadd.f32 %v940, %v957
    %v964 = vadd.f32 %v943, %v958
    %v965 = vadd.f32 %v945, %v959
    %v966 = vadd.f32 %v948, %v960
    %v967 = vadd.f32 %v950, %v961
    %v968 = vld [vmem:[%s3] sm:$0xff]
    %v969 = vld [vmem:[%s3 + $0x8] sm:$0xff]
    %v970 = vld [vmem:[%s3 + $0x10] sm:$0xff]
    %v971 = vld [vmem:[%s3 + $0x18] sm:$0xff]
    %v972 = vld [vmem:[%s3 + $0x20] sm:$0xff]
    %v973 = vld [vmem:[%s3 + $0x28] sm:$0xff]
    %v974 = vld [vmem:[#allocation5] sm:$0x7f]
    %v975 = vpack.c.bf16 %v969, %v968
    %v976 = vpack.c.bf16 %v971, %v970
    %v977 = vpack.c.bf16 %v973, %v972
    %v978 = vpack.c.bf16 %v974, %v974
    %vm979 = vcmask 56320
    %v981 = vsel %vm979, %v975, 0
    %v984 = vsel %vm979, %v976, 0
    %v987 = vsel %vm979, %v977, 0
    %vm989 = vcmask 1042432
    %vm990 = vcmask 1043456
    %v991 = vsel %vm989, 4294967295, 65535
    %v992 = vsel %vm990, %v991, 0
    %v994 = vand.u32 %v978, %v992
    %996 = vmatpush.bf16.msra.mxu0 0
    %997 = vmatpush.bf16.msra.mxu0 0
    %998 = vmatpush.bf16.msra.mxu0 0
    %999 = vmatpush.bf16.msra.mxu0 0
    %1000 = vmatpush.bf16.msra.mxu0 0
    %1001 = vmatpush.bf16.msra.mxu0 0
    %1002 = vmatpush.bf16.msra.mxu0 0
    %1003 = vmatpush.bf16.msra.mxu0 %v994
    %1004 = vmatmul.bf16.gmra.mxu0 %v981
    %v1005 = vpop.f32.mrf.mxu0
    %v1006 = vadd.f32 0.0, %v1005
    %v1007 = vpop.f32.mrf.mxu0
    %v1008 = vadd.f32 0.0, %v1007
    %1009 = vmatmul.bf16.gmra.mxu0 %v984
    %v1010 = vpop.f32.mrf.mxu0
    %v1011 = vadd.f32 0.0, %v1010
    %v1012 = vpop.f32.mrf.mxu0
    %v1013 = vadd.f32 0.0, %v1012
    %1014 = vmatmul.bf16.gmra.mxu0 %v987
    %v1015 = vpop.f32.mrf.mxu0
    %v1016 = vadd.f32 0.0, %v1015
    %v1017 = vpop.f32.mrf.mxu0
    %v1018 = vadd.f32 0.0, %v1017
    %1019 = vdwg.mxu0
    %v1020 = vadd.f32 %v962, %v1006
    %v1021 = vadd.f32 %v963, %v1008
    %v1022 = vadd.f32 %v964, %v1011
    %v1023 = vadd.f32 %v965, %v1013
    %v1024 = vadd.f32 %v966, %v1016
    %v1025 = vadd.f32 %v967, %v1018
    %v1026 = vld [vmem:[#allocation7] sm:$0x1]
    %v1028 = vperm.slane %v1026, 0
    %v1030 = vadd.f32 %v1020, %v1028
    %v1031 = vadd.f32 %v1021, %v1028
    %v1032 = vadd.f32 %v1022, %v1028
    %v1033 = vadd.f32 %v1023, %v1028
    %v1034 = vadd.f32 %v1024, %v1028
    %v1035 = vadd.f32 %v1025, %v1028
    %v1036 = vxor.u32 %v1030, 2147483648
    %v1037 = vxor.u32 %v1031, 2147483648
    %v1038 = vxor.u32 %v1032, 2147483648
    %v1039 = vxor.u32 %v1033, 2147483648
    %v1040 = vxor.u32 %v1034, 2147483648
    %v1041 = vxor.u32 %v1035, 2147483648
    %v1042 = vmul.f32 %v1036, 1.442695
    %v1043 = vpow.pop %v1042
    %v1044 = vmul.f32 %v1037, 1.442695
    %v1045 = vpow.pop %v1044
    %v1046 = vmul.f32 %v1038, 1.442695
    %v1047 = vpow.pop %v1046
    %v1048 = vmul.f32 %v1039, 1.442695
    %v1049 = vpow.pop %v1048
    %v1050 = vmul.f32 %v1040, 1.442695
    %v1051 = vpow.pop %v1050
    %v1052 = vmul.f32 %v1041, 1.442695
    %v1053 = vpow.pop %v1052
    %v1054 = vadd.f32 %v1043, 1.0
    %v1055 = vadd.f32 %v1045, 1.0
    %v1056 = vadd.f32 %v1047, 1.0
    %v1057 = vadd.f32 %v1049, 1.0
    %v1058 = vadd.f32 %v1051, 1.0
    %v1059 = vadd.f32 %v1053, 1.0
    %v1060 = vrcp.pop %v1054
    %v1061 = vmul.f32 %v1054, %v1060
    %v1062 = vsub.f32 1.0, %v1061
    %v1063 = vmul.f32 %v1060, %v1062
    %v1064 = vadd.f32 %v1060, %v1063
    %vm1065 = vweird.f32 %v1054
    %vm1066 = vweird.f32 %v1060
    %vm1067 = vmor %vm1065, %vm1066
    %v1068 = vsel %vm1067, %v1060, %v1064
    %v1069 = vand.u32 2147483647, %v1054
    %vm1070 = vcmp.eq.f32.partialorder %v1069, 8.507059e+37
    %v1071 = vand.u32 %v1054, 2147483648
    %v1072 = vor.u32 1.1754944e-38, %v1071
    %v1073 = vsel %vm1070, %v1072, %v1068
    %v1074 = vmul.f32 1.0, %v1073
    %v1075 = vrcp.pop %v1055
    %v1076 = vmul.f32 %v1055, %v1075
    %v1077 = vsub.f32 1.0, %v1076
    %v1078 = vmul.f32 %v1075, %v1077
    %v1079 = vadd.f32 %v1075, %v1078
    %vm1080 = vweird.f32 %v1055
    %vm1081 = vweird.f32 %v1075
    %vm1082 = vmor %vm1080, %vm1081
    %v1083 = vsel %vm1082, %v1075, %v1079
    %v1084 = vand.u32 2147483647, %v1055
    %vm1085 = vcmp.eq.f32.partialorder %v1084, 8.507059e+37
    %v1086 = vand.u32 %v1055, 2147483648
    %v1087 = vor.u32 1.1754944e-38, %v1086
    %v1088 = vsel %vm1085, %v1087, %v1083
    %v1089 = vmul.f32 1.0, %v1088
    %v1090 = vrcp.pop %v1056
    %v1091 = vmul.f32 %v1056, %v1090
    %v1092 = vsub.f32 1.0, %v1091
    %v1093 = vmul.f32 %v1090, %v1092
    %v1094 = vadd.f32 %v1090, %v1093
    %vm1095 = vweird.f32 %v1056
    %vm1096 = vweird.f32 %v1090
    %vm1097 = vmor %vm1095, %vm1096
    %v1098 = vsel %vm1097, %v1090, %v1094
    %v1099 = vand.u32 2147483647, %v1056
    %vm1100 = vcmp.eq.f32.partialorder %v1099, 8.507059e+37
    %v1101 = vand.u32 %v1056, 2147483648
    %v1102 = vor.u32 1.1754944e-38, %v1101
    %v1103 = vsel %vm1100, %v1102, %v1098
    %v1104 = vmul.f32 1.0, %v1103
    %v1105 = vrcp.pop %v1057
    %v1106 = vmul.f32 %v1057, %v1105
    %v1107 = vsub.f32 1.0, %v1106
    %v1108 = vmul.f32 %v1105, %v1107
    %v1109 = vadd.f32 %v1105, %v1108
    %vm1110 = vweird.f32 %v1057
    %vm1111 = vweird.f32 %v1105
    %vm1112 = vmor %vm1110, %vm1111
    %v1113 = vsel %vm1112, %v1105, %v1109
    %v1114 = vand.u32 2147483647, %v1057
    %vm1115 = vcmp.eq.f32.partialorder %v1114, 8.507059e+37
    %v1116 = vand.u32 %v1057, 2147483648
    %v1117 = vor.u32 1.1754944e-38, %v1116
    %v1118 = vsel %vm1115, %v1117, %v1113
    %v1119 = vmul.f32 1.0, %v1118
    %v1120 = vrcp.pop %v1058
    %v1121 = vmul.f32 %v1058, %v1120
    %v1122 = vsub.f32 1.0, %v1121
    %v1123 = vmul.f32 %v1120, %v1122
    %v1124 = vadd.f32 %v1120, %v1123
    %vm1125 = vweird.f32 %v1058
    %vm1126 = vweird.f32 %v1120
    %vm1127 = vmor %vm1125, %vm1126
    %v1128 = vsel %vm1127, %v1120, %v1124
    %v1129 = vand.u32 2147483647, %v1058
    %vm1130 = vcmp.eq.f32.partialorder %v1129, 8.507059e+37
    %v1131 = vand.u32 %v1058, 2147483648
    %v1132 = vor.u32 1.1754944e-38, %v1131
    %v1133 = vsel %vm1130, %v1132, %v1128
    %v1134 = vmul.f32 1.0, %v1133
    %v1135 = vrcp.pop %v1059
    %v1136 = vmul.f32 %v1059, %v1135
    %v1137 = vsub.f32 1.0, %v1136
    %v1138 = vmul.f32 %v1135, %v1137
    %v1139 = vadd.f32 %v1135, %v1138
    %vm1140 = vweird.f32 %v1059
    %vm1141 = vweird.f32 %v1135
    %vm1142 = vmor %vm1140, %vm1141
    %v1143 = vsel %vm1142, %v1135, %v1139
    %v1144 = vand.u32 2147483647, %v1059
    %vm1145 = vcmp.eq.f32.partialorder %v1144, 8.507059e+37
    %v1146 = vand.u32 %v1059, 2147483648
    %v1147 = vor.u32 1.1754944e-38, %v1146
    %v1148 = vsel %vm1145, %v1147, %v1143
    %v1149 = vmul.f32 1.0, %v1148
    %v1150 = vmul.f32 %v1030, %v1074
    %v1151 = vmul.f32 %v1031, %v1089
    %v1152 = vmul.f32 %v1032, %v1104
    %v1153 = vmul.f32 %v1033, %v1119
    %v1154 = vmul.f32 %v1034, %v1134
    %v1155 = vmul.f32 %v1035, %v1149
    %v1156 = vld [vmem:[%s39] sm:$0xff]
    %v1157 = vld [vmem:[%s39 + $0x8] sm:$0xff]
    %v1158 = vld [vmem:[%s39 + $0x10] sm:$0xff]
    %v1159 = vld [vmem:[%s39 + $0x18] sm:$0xff]
    %v1160 = vpack.c.bf16 %v1151, %v1150
    %v1161 = vpack.c.bf16 %v1153, %v1152
    %v1162 = vpack.c.bf16 %v1155, %v1154
    %v1163 = vpack.c.bf16 %v1157, %v1156
    %v1164 = vpack.c.bf16 %v1159, %v1158
    %v1165 = vld [vmem:[#allocation8] sm:$0x1]
    %v1167 = vperm.slane %v1165, 0
    %v1170 = vsel %vm294, %v1160, 0
    %v1173 = vsel %vm294, %v1161, 0
    %v1176 = vsel %vm294, %v1162, 0
    %1178 = vmatpush.bf16.msra.mxu0 0
    %1179 = vmatpush.bf16.msra.mxu0 0
    %1180 = vmatpush.bf16.msra.mxu0 0
    %1181 = vmatpush.bf16.msra.mxu0 0
    %1182 = vmatpush.bf16.msra.mxu0 0
    %1183 = vmatpush.bf16.msra.mxu0 0
    %1184 = vmatpush.bf16.msra.mxu0 %v1164
    %1185 = vmatpush.bf16.msra.mxu0 %v1163
    %1186 = vmatmul.bf16.gmra.mxu0 %v1170
    %v1187 = vpop.f32.mrf.mxu0
    %v1188 = vadd.f32 %v1167, %v1187
    %v1189 = vpop.f32.mrf.mxu0
    %v1190 = vadd.f32 %v1167, %v1189
    %1191 = vmatmul.bf16.gmra.mxu0 %v1173
    %v1192 = vpop.f32.mrf.mxu0
    %v1193 = vadd.f32 %v1167, %v1192
    %v1194 = vpop.f32.mrf.mxu0
    %v1195 = vadd.f32 %v1167, %v1194
    %1196 = vmatmul.bf16.gmra.mxu0 %v1176
    %v1197 = vpop.f32.mrf.mxu0
    %v1198 = vadd.f32 %v1167, %v1197
    %v1199 = vpop.f32.mrf.mxu0
    %v1200 = vadd.f32 %v1167, %v1199
    %1201 = vdwg.mxu0
    %v1202 = vxor.u32 %v1188, 2147483648
    %v1203 = vxor.u32 %v1190, 2147483648
    %v1204 = vxor.u32 %v1193, 2147483648
    %v1205 = vxor.u32 %v1195, 2147483648
    %v1206 = vxor.u32 %v1198, 2147483648
    %v1207 = vxor.u32 %v1200, 2147483648
    %v1208 = vmul.f32 %v1202, 1.442695
    %v1209 = vpow.pop %v1208
    %v1210 = vmul.f32 %v1203, 1.442695
    %v1211 = vpow.pop %v1210
    %v1212 = vmul.f32 %v1204, 1.442695
    %v1213 = vpow.pop %v1212
    %v1214 = vmul.f32 %v1205, 1.442695
    %v1215 = vpow.pop %v1214
    %v1216 = vmul.f32 %v1206, 1.442695
    %v1217 = vpow.pop %v1216
    %v1218 = vmul.f32 %v1207, 1.442695
    %v1219 = vpow.pop %v1218
    %v1220 = vadd.f32 %v1209, 1.0
    %v1221 = vadd.f32 %v1211, 1.0
    %v1222 = vadd.f32 %v1213, 1.0
    %v1223 = vadd.f32 %v1215, 1.0
    %v1224 = vadd.f32 %v1217, 1.0
    %v1225 = vadd.f32 %v1219, 1.0
    %v1226 = vrcp.pop %v1220
    %v1227 = vmul.f32 %v1220, %v1226
    %v1228 = vsub.f32 1.0, %v1227
    %v1229 = vmul.f32 %v1226, %v1228
    %v1230 = vadd.f32 %v1226, %v1229
    %vm1231 = vweird.f32 %v1220
    %vm1232 = vweird.f32 %v1226
    %vm1233 = vmor %vm1231, %vm1232
    %v1234 = vsel %vm1233, %v1226, %v1230
    %v1235 = vand.u32 2147483647, %v1220
    %vm1236 = vcmp.eq.f32.partialorder %v1235, 8.507059e+37
    %v1237 = vand.u32 %v1220, 2147483648
    %v1238 = vor.u32 1.1754944e-38, %v1237
    %v1239 = vsel %vm1236, %v1238, %v1234
    %v1240 = vmul.f32 1.0, %v1239
    %v1241 = vrcp.pop %v1221
    %v1242 = vmul.f32 %v1221, %v1241
    %v1243 = vsub.f32 1.0, %v1242
    %v1244 = vmul.f32 %v1241, %v1243
    %v1245 = vadd.f32 %v1241, %v1244
    %vm1246 = vweird.f32 %v1221
    %vm1247 = vweird.f32 %v1241
    %vm1248 = vmor %vm1246, %vm1247
    %v1249 = vsel %vm1248, %v1241, %v1245
    %v1250 = vand.u32 2147483647, %v1221
    %vm1251 = vcmp.eq.f32.partialorder %v1250, 8.507059e+37
    %v1252 = vand.u32 %v1221, 2147483648
    %v1253 = vor.u32 1.1754944e-38, %v1252
    %v1254 = vsel %vm1251, %v1253, %v1249
    %v1255 = vmul.f32 1.0, %v1254
    %v1256 = vrcp.pop %v1222
    %v1257 = vmul.f32 %v1222, %v1256
    %v1258 = vsub.f32 1.0, %v1257
    %v1259 = vmul.f32 %v1256, %v1258
    %v1260 = vadd.f32 %v1256, %v1259
    %vm1261 = vweird.f32 %v1222
    %vm1262 = vweird.f32 %v1256
    %vm1263 = vmor %vm1261, %vm1262
    %v1264 = vsel %vm1263, %v1256, %v1260
    %v1265 = vand.u32 2147483647, %v1222
    %vm1266 = vcmp.eq.f32.partialorder %v1265, 8.507059e+37
    %v1267 = vand.u32 %v1222, 2147483648
    %v1268 = vor.u32 1.1754944e-38, %v1267
    %v1269 = vsel %vm1266, %v1268, %v1264
    %v1270 = vmul.f32 1.0, %v1269
    %v1271 = vrcp.pop %v1223
    %v1272 = vmul.f32 %v1223, %v1271
    %v1273 = vsub.f32 1.0, %v1272
    %v1274 = vmul.f32 %v1271, %v1273
    %v1275 = vadd.f32 %v1271, %v1274
    %vm1276 = vweird.f32 %v1223
    %vm1277 = vweird.f32 %v1271
    %vm1278 = vmor %vm1276, %vm1277
    %v1279 = vsel %vm1278, %v1271, %v1275
    %v1280 = vand.u32 2147483647, %v1223
    %vm1281 = vcmp.eq.f32.partialorder %v1280, 8.507059e+37
    %v1282 = vand.u32 %v1223, 2147483648
    %v1283 = vor.u32 1.1754944e-38, %v1282
    %v1284 = vsel %vm1281, %v1283, %v1279
    %v1285 = vmul.f32 1.0, %v1284
    %v1286 = vrcp.pop %v1224
    %v1287 = vmul.f32 %v1224, %v1286
    %v1288 = vsub.f32 1.0, %v1287
    %v1289 = vmul.f32 %v1286, %v1288
    %v1290 = vadd.f32 %v1286, %v1289
    %vm1291 = vweird.f32 %v1224
    %vm1292 = vweird.f32 %v1286
    %vm1293 = vmor %vm1291, %vm1292
    %v1294 = vsel %vm1293, %v1286, %v1290
    %v1295 = vand.u32 2147483647, %v1224
    %vm1296 = vcmp.eq.f32.partialorder %v1295, 8.507059e+37
    %v1297 = vand.u32 %v1224, 2147483648
    %v1298 = vor.u32 1.1754944e-38, %v1297
    %v1299 = vsel %vm1296, %v1298, %v1294
    %v1300 = vmul.f32 1.0, %v1299
    %v1301 = vrcp.pop %v1225
    %v1302 = vmul.f32 %v1225, %v1301
    %v1303 = vsub.f32 1.0, %v1302
    %v1304 = vmul.f32 %v1301, %v1303
    %v1305 = vadd.f32 %v1301, %v1304
    %vm1306 = vweird.f32 %v1225
    %vm1307 = vweird.f32 %v1301
    %vm1308 = vmor %vm1306, %vm1307
    %v1309 = vsel %vm1308, %v1301, %v1305
    %v1310 = vand.u32 2147483647, %v1225
    %vm1311 = vcmp.eq.f32.partialorder %v1310, 8.507059e+37
    %v1312 = vand.u32 %v1225, 2147483648
    %v1313 = vor.u32 1.1754944e-38, %v1312
    %v1314 = vsel %vm1311, %v1313, %v1309
    %v1315 = vmul.f32 1.0, %v1314
    %v1316 = vmul.f32 %v1188, %v1240
    %v1317 = vmul.f32 %v1190, %v1255
    %v1318 = vmul.f32 %v1193, %v1270
    %v1319 = vmul.f32 %v1195, %v1285
    %v1320 = vmul.f32 %v1198, %v1300
    %v1321 = vmul.f32 %v1200, %v1315
    %v1322 = vlaneseq
    %v1323 = vshrl.u32 %v1322, 7
    %v1324 = vadd.s32 %v1323, 8
    %v1325 = vld [vmem:[%s11] sm:$0x1]
    %v1326 = vperm.slane %v1325, 0
    %vm1327 = vcmp.eq.s32.totalorder %v1323, %v1326
    %vm1328 = vcmp.eq.s32.totalorder %v1324, %v1326
    %v1329 = vsel %vm1327, 1, 0
    %v1330 = vsel %vm1328, 1, 0
    %v1331 = vcvt.s32.f32 %v1329
    %v1332 = vcvt.s32.f32 %v1330
    %v1333 = vpack.c.bf16 %v1332, %v1331
    %v1334 = vpack.c.bf16 %v1317, %v1316
    %v1335 = vpack.c.bf16 %v1319, %v1318
    %v1336 = vpack.c.bf16 %v1321, %v1320
    %vm1337 = vcmask 392192
    %v1339 = vsel %vm1337, %v1333, 0
    %1341 = vmatpush.bf16.msra.mxu0 0
    %1342 = vmatpush.bf16.msra.mxu0 0
    %1343 = vmatpush.bf16.msra.mxu0 0
    %1344 = vmatpush.bf16.msra.mxu0 0
    %1345 = vmatpush.bf16.msra.mxu0 0
    %1346 = vmatpush.bf16.msra.mxu0 %v1336
    %1347 = vmatpush.bf16.msra.mxu0 %v1335
    %1348 = vmatpush.bf16.msra.mxu0 %v1334
    %1349 = vmatmul.bf16.gmra.mxu0 %v1339
    %v1350 = vpop.f32.mrf.mxu0
    %v1351 = vadd.f32 0.0, %v1350
    %v1352 = vpop.f32.mrf.mxu0
    %v1353 = vadd.f32 0.0, %v1352
    %1354 = vdwg.mxu0
    %v1355 = vld [vmem:[%s43] sm:$0xff]
    %v1356 = vld [vmem:[%s43 + $0x8] sm:$0xff]
    %v1357 = vld [vmem:[%s43 + $0x10] sm:$0xff]
    %v1358 = vld [vmem:[%s43 + $0x18] sm:$0xff]
    %v1359 = vpack.c.bf16 %v1356, %v1355
    %v1360 = vpack.c.bf16 %v1358, %v1357
    %v1361 = vld [vmem:[%s45] sm:$0xff]
    %v1362 = vld [vmem:[%s45 + $0x8] sm:$0xff]
    %v1363 = vld [vmem:[%s45 + $0x10] sm:$0xff]
    %v1364 = vld [vmem:[%s45 + $0x18] sm:$0xff]
    %v1365 = vpack.c.bf16 %v1353, %v1351
    %v1366 = vpack.c.bf16 %v1362, %v1361
    %v1367 = vpack.c.bf16 %v1364, %v1363
    %v1369 = vsel %vm294, %v1365, 0
    %1371 = vmatpush.bf16.msra.mxu0 0
    %1372 = vmatpush.bf16.msra.mxu0 0
    %1373 = vmatpush.bf16.msra.mxu0 0
    %1374 = vmatpush.bf16.msra.mxu0 0
    %1375 = vmatpush.bf16.msra.mxu0 0
    %1376 = vmatpush.bf16.msra.mxu0 0
    %1377 = vmatpush.bf16.msra.mxu0 %v1367
    %1378 = vmatpush.bf16.msra.mxu0 %v1366
    %1379 = vmatmul.bf16.gmra.mxu0 %v1369
    %v1380 = vpop.f32.mrf.mxu0
    %v1381 = vadd.f32 0.0, %v1380
    %v1382 = vpop.f32.mrf.mxu0
    %v1383 = vadd.f32 0.0, %v1382
    %1384 = vdwg.mxu0
    %v1386 = vsel %vm294, %v712, 0
    %1388 = vmatpush.bf16.msra.mxu0 0
    %1389 = vmatpush.bf16.msra.mxu0 0
    %1390 = vmatpush.bf16.msra.mxu0 0
    %1391 = vmatpush.bf16.msra.mxu0 0
    %1392 = vmatpush.bf16.msra.mxu0 0
    %1393 = vmatpush.bf16.msra.mxu0 0
    %1394 = vmatpush.bf16.msra.mxu0 %v1360
    %1395 = vmatpush.bf16.msra.mxu0 %v1359
    %1396 = vmatmul.bf16.gmra.mxu0 %v1386
    %v1397 = vpop.f32.mrf.mxu0
    %v1398 = vadd.f32 %v1381, %v1397
    %v1399 = vpop.f32.mrf.mxu0
    %v1400 = vadd.f32 %v1383, %v1399
    %1401 = vdwg.mxu0
    %v1402 = vld [vmem:[#allocation10] sm:$0x1]
    %v1404 = vperm.slane %v1402, 0
    %v1406 = vadd.f32 %v1398, %v1404
    %v1407 = vadd.f32 %v1400, %v1404
    %v1408 = vxor.u32 %v1406, 2147483648
    %v1409 = vxor.u32 %v1407, 2147483648
    %v1410 = vmul.f32 %v1408, 1.442695
    %v1411 = vpow.pop %v1410
    %v1412 = vmul.f32 %v1409, 1.442695
    %v1413 = vpow.pop %v1412
    %v1414 = vadd.f32 %v1411, 1.0
    %v1415 = vadd.f32 %v1413, 1.0
    %v1416 = vrcp.pop %v1414
    %v1417 = vmul.f32 %v1414, %v1416
    %v1418 = vsub.f32 1.0, %v1417
    %v1419 = vmul.f32 %v1416, %v1418
    %v1420 = vadd.f32 %v1416, %v1419
    %vm1421 = vweird.f32 %v1414
    %vm1422 = vweird.f32 %v1416
    %vm1423 = vmor %vm1421, %vm1422
    %v1424 = vsel %vm1423, %v1416, %v1420
    %v1425 = vand.u32 2147483647, %v1414
    %vm1426 = vcmp.eq.f32.partialorder %v1425, 8.507059e+37
    %v1427 = vand.u32 %v1414, 2147483648
    %v1428 = vor.u32 1.1754944e-38, %v1427
    %v1429 = vsel %vm1426, %v1428, %v1424
    %v1430 = vmul.f32 1.0, %v1429
    %v1431 = vrcp.pop %v1415
    %v1432 = vmul.f32 %v1415, %v1431
    %v1433 = vsub.f32 1.0, %v1432
    %v1434 = vmul.f32 %v1431, %v1433
    %v1435 = vadd.f32 %v1431, %v1434
    %vm1436 = vweird.f32 %v1415
    %vm1437 = vweird.f32 %v1431
    %vm1438 = vmor %vm1436, %vm1437
    %v1439 = vsel %vm1438, %v1431, %v1435
    %v1440 = vand.u32 2147483647, %v1415
    %vm1441 = vcmp.eq.f32.partialorder %v1440, 8.507059e+37
    %v1442 = vand.u32 %v1415, 2147483648
    %v1443 = vor.u32 1.1754944e-38, %v1442
    %v1444 = vsel %vm1441, %v1443, %v1439
    %v1445 = vmul.f32 1.0, %v1444
    %v1446 = vmul.f32 %v1406, %v1430
    %v1447 = vmul.f32 %v1407, %v1445
    %v1448 = vld [vmem:[%s49] sm:$0xff]
    %v1449 = vld [vmem:[%s49 + $0x8] sm:$0xff]
    %v1450 = vld [vmem:[%s49 + $0x10] sm:$0xff]
    %v1451 = vld [vmem:[%s49 + $0x18] sm:$0xff]
    %v1452 = vpack.c.bf16 %v1447, %v1446
    %v1453 = vpack.c.bf16 %v1449, %v1448
    %v1454 = vpack.c.bf16 %v1451, %v1450
    %v1455 = vld [vmem:[#allocation11] sm:$0x1]
    %v1457 = vperm.slane %v1455, 0
    %v1460 = vsel %vm294, %v1452, 0
    %1462 = vmatpush.bf16.msra.mxu0 0
    %1463 = vmatpush.bf16.msra.mxu0 0
    %1464 = vmatpush.bf16.msra.mxu0 0
    %1465 = vmatpush.bf16.msra.mxu0 0
    %1466 = vmatpush.bf16.msra.mxu0 0
    %1467 = vmatpush.bf16.msra.mxu0 0
    %1468 = vmatpush.bf16.msra.mxu0 %v1454
    %1469 = vmatpush.bf16.msra.mxu0 %v1453
    %1470 = vmatmul.bf16.gmra.mxu0 %v1460
    %v1471 = vpop.f32.mrf.mxu0
    %v1472 = vadd.f32 %v1457, %v1471
    %v1473 = vpop.f32.mrf.mxu0
    %v1474 = vadd.f32 %v1457, %v1473
    %1475 = vdwg.mxu0
    %v1476 = vld [vmem:[%s53] sm:$0xff]
    %v1477 = vld [vmem:[%s53 + $0x8] sm:$0xff]
    %v1478 = vld [vmem:[%s53 + $0x10] sm:$0xff]
    %v1479 = vld [vmem:[%s53 + $0x18] sm:$0xff]
    %v1480 = vpack.c.bf16 %v1474, %v1472
    %v1481 = vpack.c.bf16 %v1477, %v1476
    %v1482 = vpack.c.bf16 %v1479, %v1478
    %v1483 = vld [vmem:[#allocation13] sm:$0x1]
    %v1485 = vperm.slane %v1483, 0
    %v1488 = vsel %vm294, %v1480, 0
    %1490 = vmatpush.bf16.msra.mxu0 0
    %1491 = vmatpush.bf16.msra.mxu0 0
    %1492 = vmatpush.bf16.msra.mxu0 0
    %1493 = vmatpush.bf16.msra.mxu0 0
    %1494 = vmatpush.bf16.msra.mxu0 0
    %1495 = vmatpush.bf16.msra.mxu0 0
    %1496 = vmatpush.bf16.msra.mxu0 %v1482
    %1497 = vmatpush.bf16.msra.mxu0 %v1481
    %1498 = vmatmul.bf16.gmra.mxu0 %v1488
    %v1499 = vpop.f32.mrf.mxu0
    %v1500 = vadd.f32 %v1485, %v1499
    %v1501 = vpop.f32.mrf.mxu0
    %v1502 = vadd.f32 %v1485, %v1501
    %1503 = vdwg.mxu0
    %v1504 = vld [vmem:[%s57] sm:$0xff]
    %v1505 = vld [vmem:[%s57 + $0x8] sm:$0xff]
    %v1506 = vld [vmem:[%s57 + $0x10] sm:$0xff]
    %v1507 = vld [vmem:[%s57 + $0x18] sm:$0xff]
    %v1508 = vpack.c.bf16 %v1505, %v1504
    %v1509 = vpack.c.bf16 %v1507, %v1506
    %v1510 = vld [vmem:[#allocation14] sm:$0x1]
    %v1512 = vperm.slane %v1510, 0
    %1514 = vmatpush.bf16.msra.mxu0 0
    %1515 = vmatpush.bf16.msra.mxu0 0
    %1516 = vmatpush.bf16.msra.mxu0 0
    %1517 = vmatpush.bf16.msra.mxu0 0
    %1518 = vmatpush.bf16.msra.mxu0 0
    %1519 = vmatpush.bf16.msra.mxu0 0
    %1520 = vmatpush.bf16.msra.mxu0 %v1509
    %1521 = vmatpush.bf16.msra.mxu0 %v1508
    %1522 = vmatmul.bf16.gmra.mxu0 %v1488
    %v1523 = vpop.f32.mrf.mxu0
    %v1524 = vadd.f32 %v1512, %v1523
    %v1525 = vpop.f32.mrf.mxu0
    %v1526 = vadd.f32 %v1512, %v1525
    %1527 = vdwg.mxu0
    %v1528 = vld [vmem:[#allocation16] sm:$0xff]
    %v1529 = vld [vmem:[#allocation16 + $0x8] sm:$0xff]
    %v1530 = vmul.f32 %v1524, 1.442695
    %v1531 = vpow.pop %v1530
    %v1532 = vmul.f32 %v1526, 1.442695
    %v1533 = vpow.pop %v1532
    %v1534 = vmul.f32 %v1528, %v1531
    %v1535 = vmul.f32 %v1529, %v1533
    %v1536 = vadd.f32 %v1534, %v1500
    %v1537 = vadd.f32 %v1535, %v1502
    %1538 = vst.msk [vmem:[#allocation17] sm:$0xff] %vm274, %v1536
    %1539 = vst.msk [vmem:[#allocation17 + $0x8] sm:$0xff] %vm274, %v1537
    %1540 = vst.msk [vmem:[#allocation18] sm:$0xff] %vm274, %v1500
    %1541 = vst.msk [vmem:[#allocation18 + $0x8] sm:$0xff] %vm274, %v1502
    %1542 = vst.msk [vmem:[#allocation20] sm:$0xff] %vm274, %v1524
    %1543 = vst.msk [vmem:[#allocation20 + $0x8] sm:$0xff] %vm274, %v1526
    // Predicated region
    $region162: #{encoder_forward.1} parent=1 // pred_check
      _
    $region163: #{encoder_forward.1} parent=1 // pred_check_branch
      %1545 = sbr.rel (0) target = $region165
    $region164: #{encoder_forward.1} parent=1 // pred_region
      %1547 = vsyncadd [#allocation4], 0
      %s1548 = sshll.u32 [#allocation17], 4
      %s1549 = int_to_ptr.vmem [resolvable:$true] %s1548
      %s1550 = sshll.u32 %s63, 4
      %s1551 = int_to_ptr.hbm [resolvable:$true] %s1550
      %1556 = dma.vmem_to_hbm [thread:$0]  %s1549, 256, %s1551, [#allocation4], 128, 128, 8
    $region165: #{encoder_forward.1} parent=1 // pred_fallthru
      _
    // Predicated region
    $region166: #{encoder_forward.1} parent=1 // pred_check
      _
    $region167: #{encoder_forward.1} parent=1 // pred_check_branch
      %1558 = sbr.rel (0) target = $region169
    $region168: #{encoder_forward.1} parent=1 // pred_region
      %1560 = vsyncadd [#allocation19], 0
      %s1561 = sshll.u32 [#allocation18], 4
      %s1562 = int_to_ptr.vmem [resolvable:$true] %s1561
      %s1563 = sshll.u32 %s65, 4
      %s1564 = int_to_ptr.hbm [resolvable:$true] %s1563
      %1569 = dma.vmem_to_hbm [thread:$0]  %s1562, 256, %s1564, [#allocation19], 128, 128, 8
    $region169: #{encoder_forward.1} parent=1 // pred_fallthru
      _
    // Predicated region
    $region170: #{encoder_forward.1} parent=1 // pred_check
      _
    $region171: #{encoder_forward.1} parent=1 // pred_check_branch
      %1571 = sbr.rel (0) target = $region173
    $region172: #{encoder_forward.1} parent=1 // pred_region
      %1573 = vsyncadd [#allocation19], 0
      %s1574 = sshll.u32 [#allocation20], 4
      %s1575 = int_to_ptr.vmem [resolvable:$true] %s1574
      %s1576 = sshll.u32 %s67, 4
      %s1577 = int_to_ptr.hbm [resolvable:$true] %s1576
      %1582 = dma.vmem_to_hbm [thread:$0]  %s1575, 256, %s1577, [#allocation19], 128, 128, 8
    $region173: #{encoder_forward.1} parent=1 // pred_fallthru
      _
    // Predicated region
    $region174: #{encoder_forward.1} parent=1 // pred_check
      _
    $region175: #{encoder_forward.1} parent=1 // pred_check_branch
      %1584 = sbr.rel (0) target = $region177
    $region176: #{encoder_forward.1} parent=1 // pred_region
      %1586 = dma.done [#allocation4], 256
    $region177: #{encoder_forward.1} parent=1 // pred_fallthru
      _
    // Predicated region
    $region178: #{encoder_forward.1} parent=1 // pred_check
      _
    $region179: #{encoder_forward.1} parent=1 // pred_check_branch
      %1588 = sbr.rel (0) target = $region181
    $region180: #{encoder_forward.1} parent=1 // pred_region
      %1590 = dma.done [#allocation19], 256
    $region181: #{encoder_forward.1} parent=1 // pred_fallthru
      _
    // Predicated region
    $region182: #{encoder_forward.1} parent=1 // pred_check
      _
    $region183: #{encoder_forward.1} parent=1 // pred_check_branch
      %1592 = sbr.rel (0) target = $region185
    $region184: #{encoder_forward.1} parent=1 // pred_region
      %1594 = dma.done [#allocation19], 256
    $region185: #{encoder_forward.1} parent=1 // pred_fallthru
      _
    %1595 = vsyncpa [#allocation3], 1
    %1596 = vsyncpa [#allocation6], 1
    %1597 = vsyncpa [#allocation9], 1
    %1598 = vsyncpa [#allocation12], 1
    %1599 = vsyncpa [#allocation15], 1
    %1600 = vsyncpa [#allocation4], 1
    %1601 = vsyncpa [#allocation19], 1

</llo_original>
